<compile_context>
chip_gen: v5e
topology: v5e:2x2
jax: 0.10.0
libtpu: 0.0.40
codegen_flags: <defaults>
</compile_context>

<pallas_src>
import jax
import jax.numpy as jnp
from jax.experimental import pallas as pl
from jax.experimental.pallas import tpu as pltpu

BN_EPS = 1e-5


# ---------------------------------------------------------------------------
# helpers
# ---------------------------------------------------------------------------
def _conv1x1(w, x):
    """(Co, Ci) @ (Ci, T) -> (Co, T), channels-on-sublane layout.

    For tiny contraction dims the MXU is almost entirely idle and its push/pop
    latency dominates, so unroll as VPU broadcast-FMA (one (Co,1)x(1,T) FMA per
    input channel).  For large channel counts use the MXU.
    """
    co, ci = w.shape
    if ci <= 16:
        acc = w[:, 0:1] * x[0:1, :]
        for c in range(1, ci):
            acc = acc + w[:, c:c + 1] * x[c:c + 1, :]
        return acc
    return jnp.dot(w, x, preferred_element_type=jnp.float32)


def _pick_tile(hw, c, cb):
    """Largest lane-tile T that divides HW, is a multiple of 128 (lane-dense
    stores) unless it is all of HW, and keeps the per-grid-step VMEM footprint
    (double-buffered x/h/out blocks + in-register intermediates) around a few
    MiB — sized for v7x's 64 MiB VMEM, trivially fine on v5e/v6e."""
    bytes_per_lane = 4 * 4 * (2 * c + cb)          # ~footprint per lane element
    cap = max(128, (8 * 1024 * 1024) // bytes_per_lane)
    if hw <= cap:
        return hw
    best = None
    t = 128
    while t <= cap:
        if hw % t == 0:
            best = t
        t += 128
    # TODO(synk): if HW has no 128-multiple divisor <= cap, fall back to the
    # full row (rare; still fits for any remotely realistic C).
    return best if best is not None else hw


# ---------------------------------------------------------------------------
# kernels
# ---------------------------------------------------------------------------
def _pass1_kernel(x_ref, w1_ref, h_ref, ps_ref):
    # x_ref: (1, C, T)   w1_ref: (Cb, C)
    # h_ref: (1, Cb, T)  ps_ref: (1, 1, Cb, 2)  -> [sum(h), sum(h^2)] per channel
    x = x_ref[0]                                   # (C, T)
    h = _conv1x1(w1_ref[...], x)                   # (Cb, T)
    h_ref[0] = h
    s = jnp.sum(h, axis=1, keepdims=True)          # (Cb, 1)  lane reduce (XLU)
    sq = jnp.sum(h * h, axis=1, keepdims=True)     # (Cb, 1)
    ps_ref[0, 0] = jnp.concatenate([s, sq], axis=1)


def _pass2_kernel(h_ref, s1_ref, t1_ref, w2_ref, ps_ref):
    # h_ref: (1, Cb, T)  s1/t1: (Cb, 1) folded BN1 scale/shift  w2_ref: (C, Cb)
    # ps_ref: (1, 1, C, 2) -> [sum(e), sum(e^2)] per channel
    h = h_ref[0]                                   # (Cb, T)
    a = jnp.maximum(h * s1_ref[...] + t1_ref[...], 0.0)
    e = _conv1x1(w2_ref[...], a)                   # (C, T)
    s = jnp.sum(e, axis=1, keepdims=True)
    sq = jnp.sum(e * e, axis=1, keepdims=True)
    ps_ref[0, 0] = jnp.concatenate([s, sq], axis=1)


def _pass3_kernel(x_ref, h_ref, s1_ref, t1_ref, w2_ref, s2_ref, t2_ref,
                  pw_ref, o_ref):
    # x_ref: (1, C, T)  h_ref: (1, Cb, T)  s*/t*: folded BN scale/shift
    # pw_ref: (1,) in SMEM   o_ref: (1, C, T)
    pw = pw_ref[0]
    x = x_ref[0]                                   # (C, T)
    a = jnp.maximum(h_ref[0] * s1_ref[...] + t1_ref[...], 0.0)   # (Cb, T)
    e = _conv1x1(w2_ref[...], a)                   # (C, T)
    y = jnp.maximum(e * s2_ref[...] + t2_ref[...], 0.0)
    o_ref[0] = pw * x + (1.0 - pw) * y


# ---------------------------------------------------------------------------
# wrapper
# ---------------------------------------------------------------------------
@jax.jit
def information_bottleneck(x_nchw, w1, gamma1, beta1, w2, gamma2, beta2,
                           preserve_weight):
    """x_nchw: (N, C, H, W) f32.  w1: (Cb, C), w2: (C, Cb) (PyTorch 1x1 conv
    weights with the spatial dims squeezed).  BatchNorm in training mode."""
    N, C, H, W = x_nchw.shape
    Cb = w1.shape[0]
    HW = H * W
    M = N * HW

    f32 = jnp.float32
    x3 = x_nchw.astype(f32).reshape(N, C, HW)      # free reshape, stays NCHW
    w1 = w1.astype(f32)
    w2 = w2.astype(f32)
    pw = jnp.asarray(preserve_weight, f32).reshape(1)

    T = _pick_tile(HW, C, Cb)
    Tn = HW // T
    grid = (N, Tn)
    par = pltpu.CompilerParams(dimension_semantics=("parallel", "parallel"))

    # ---- pass 1: compress conv per tile; stash h; per-tile channel stats ----
    h3, ps1 = pl.pallas_call(
        _pass1_kernel,
        out_shape=(jax.ShapeDtypeStruct((N, Cb, HW), f32),
                   jax.ShapeDtypeStruct((N, Tn, Cb, 2), f32)),
        grid=grid,
        in_specs=[
            pl.BlockSpec((1, C, T), lambda n, t: (n, 0, t)),      # x tile
            pl.BlockSpec((Cb, C), lambda n, t: (0, 0)),           # W1
        ],
        out_specs=(
            pl.BlockSpec((1, Cb, T), lambda n, t: (n, 0, t)),     # h stash
            pl.BlockSpec((1, 1, Cb, 2), lambda n, t: (n, t, 0, 0)),
        ),
        compiler_params=par,
    )(x3, w1)

    # Finalize BN1 stats (global over N*H*W, biased var) and fold the affine.
    # NOTE: E[h^2]-E[h]^2 in f32 — fine while |mean| is not huge vs. std.
    tot1 = jnp.sum(ps1, axis=(0, 1))               # (Cb, 2)
    mu1 = tot1[:, 0] / M
    var1 = tot1[:, 1] / M - mu1 * mu1
    rstd1 = jax.lax.rsqrt(var1 + BN_EPS)
    scale1 = (gamma1 * rstd1).reshape(Cb, 1)
    shift1 = (beta1 - gamma1 * rstd1 * mu1).reshape(Cb, 1)

    # ---- pass 2: e = W2 @ relu(bn1(h)); per-tile channel stats of e ----
    ps2 = pl.pallas_call(
        _pass2_kernel,
        out_shape=jax.ShapeDtypeStruct((N, Tn, C, 2), f32),
        grid=grid,
        in_specs=[
            pl.BlockSpec((1, Cb, T), lambda n, t: (n, 0, t)),     # h tile
            pl.BlockSpec((Cb, 1), lambda n, t: (0, 0)),           # scale1
            pl.BlockSpec((Cb, 1), lambda n, t: (0, 0)),           # shift1
            pl.BlockSpec((C, Cb), lambda n, t: (0, 0)),           # W2
        ],
        out_specs=pl.BlockSpec((1, 1, C, 2), lambda n, t: (n, t, 0, 0)),
        compiler_params=par,
    )(h3, scale1, shift1, w2)

    tot2 = jnp.sum(ps2, axis=(0, 1))               # (C, 2)
    mu2 = tot2[:, 0] / M
    var2 = tot2[:, 1] / M - mu2 * mu2
    rstd2 = jax.lax.rsqrt(var2 + BN_EPS)
    scale2 = (gamma2 * rstd2).reshape(C, 1)
    shift2 = (beta2 - gamma2 * rstd2 * mu2).reshape(C, 1)

    # ---- pass 3: bn1+relu, expand conv, bn2+relu, residual blend, store ----
    out3 = pl.pallas_call(
        _pass3_kernel,
        out_shape=jax.ShapeDtypeStruct((N, C, HW), f32),
        grid=grid,
        in_specs=[
            pl.BlockSpec((1, C, T), lambda n, t: (n, 0, t)),      # x tile
            pl.BlockSpec((1, Cb, T), lambda n, t: (n, 0, t)),     # h tile
            pl.BlockSpec((Cb, 1), lambda n, t: (0, 0)),           # scale1
            pl.BlockSpec((Cb, 1), lambda n, t: (0, 0)),           # shift1
            pl.BlockSpec((C, Cb), lambda n, t: (0, 0)),           # W2
            pl.BlockSpec((C, 1), lambda n, t: (0, 0)),            # scale2
            pl.BlockSpec((C, 1), lambda n, t: (0, 0)),            # shift2
            pl.BlockSpec(memory_space=pltpu.MemorySpace.SMEM),    # preserve_weight
        ],
        out_specs=pl.BlockSpec((1, C, T), lambda n, t: (n, 0, t)),
        compiler_params=par,
    )(x3, h3, scale1, shift1, w2, scale2, shift2, pw)

    return out3.reshape(N, C, H, W)


# ---------------------------------------------------------------------------
# pure-JAX reference of the PyTorch forward (training-mode BN)
# ---------------------------------------------------------------------------
def _reference(x_nchw, w1, gamma1, beta1, w2, gamma2, beta2, pw):
    N, C, H, W = x_nchw.shape
    xf = jnp.transpose(x_nchw, (0, 2, 3, 1)).reshape(-1, C)

    def bn_relu(h, g, b):
        mu = jnp.mean(h, axis=0, keepdims=True)
        var = jnp.mean((h - mu) ** 2, axis=0, keepdims=True)
        return jnp.maximum((h - mu) / jnp.sqrt(var + BN_EPS) * g + b, 0.0)

    h = bn_relu(xf @ w1.T, gamma1, beta1)
    e = bn_relu(h @ w2.T, gamma2, beta2)
    of = pw * xf + (1.0 - pw) * e
    return jnp.transpose(of.reshape(N, H, W, C), (0, 3, 1, 2))


if __name__ == "__main__":
    key = jax.random.PRNGKey(0)
    N, C, H, W = 2, 4, 16, 16
    bottleneck_ratio = 0.5
    Cb = max(1, int(C * bottleneck_ratio))

    k_x, k_w1, k_w2, k_g1, k_b1, k_g2, k_b2 = jax.random.split(key, 7)
    x = jax.random.normal(k_x, (N, C, H, W), jnp.float32)

    # Conv weights: nn.Conv2d(.., 1, bias=False) shapes with 1x1 spatial squeezed.
    w1 = jax.random.normal(k_w1, (Cb, C), jnp.float32) * 0.5
    w2 = jax.random.normal(k_w2, (C, Cb), jnp.float32) * 0.5
    # Non-trivial BN affine parameters to exercise the full path.
    gamma1 = 1.0 + 0.1 * jax.random.normal(k_g1, (Cb,), jnp.float32)
    beta1 = 0.1 * jax.random.normal(k_b1, (Cb,), jnp.float32)
    gamma2 = 1.0 + 0.1 * jax.random.normal(k_g2, (C,), jnp.float32)
    beta2 = 0.1 * jax.random.normal(k_b2, (C,), jnp.float32)
    preserve_weight = 0.8

    out = information_bottleneck(x, w1, gamma1, beta1, w2, gamma2, beta2,
                                 preserve_weight)
    out = jax.block_until_ready(out)

    ref = _reference(x, w1, gamma1, beta1, w2, gamma2, beta2, preserve_weight)
    assert out.shape == (N, C, H, W)
    assert jnp.allclose(out, ref, atol=1e-4, rtol=1e-4), \
        float(jnp.max(jnp.abs(out - ref)))

    print("KERNEL_OK")
</pallas_src>

<mosaic_0001>
module attributes {stable_mosaic.version = 11 : i64} {
  func.func @_pass1_kernel(%arg0: i32, %arg1: i32, %arg2: memref<1x4x256xf32, #tpu.memory_space<vmem>>, %arg3: memref<2x4xf32, #tpu.memory_space<vmem>>, %arg4: memref<1x2x256xf32, #tpu.memory_space<vmem>>, %arg5: memref<1x1x2x2xf32, #tpu.memory_space<vmem>>) attributes {dimension_semantics = [#tpu.dimension_semantics<parallel>, #tpu.dimension_semantics<parallel>], iteration_bounds = array<i64: 2, 1>, scalar_prefetch = 0 : i64, scratch_operands = 0 : i64, tpu.core_type = #tpu.core_type<tc>, window_params = [{transform_indices = @transform_0, window_bounds = array<i64: 1, 4, 256>}, {pipeline_mode = #tpu.pipeline_mode<synchronous>, transform_indices = @transform_1, window_bounds = array<i64: 2, 4>}, {transform_indices = @transform_2, window_bounds = array<i64: 1, 2, 256>}, {transform_indices = @transform_3, window_bounds = array<i64: 1, 1, 2, 2>}]} {
    %c0 = arith.constant 0 : index
    %c0_0 = arith.constant 0 : index
    %c0_1 = arith.constant 0 : index
    %0 = vector.load %arg2[%c0, %c0_0, %c0_1] : memref<1x4x256xf32, #tpu.memory_space<vmem>>, vector<1x4x256xf32>
    %1 = vector.shape_cast %0 : vector<1x4x256xf32> to vector<4x256xf32>
    %c0_2 = arith.constant 0 : index
    %c0_3 = arith.constant 0 : index
    %2 = vector.load %arg3[%c0_2, %c0_3] : memref<2x4xf32, #tpu.memory_space<vmem>>, vector<2x4xf32>
    %3 = vector.extract_strided_slice %2 {offsets = [0, 0], sizes = [2, 1], strides = [1, 1]} : vector<2x4xf32> to vector<2x1xf32>
    %4 = vector.extract_strided_slice %1 {offsets = [0, 0], sizes = [1, 256], strides = [1, 1]} : vector<4x256xf32> to vector<1x256xf32>
    %5 = vector.broadcast %3 : vector<2x1xf32> to vector<2x256xf32>
    %6 = vector.broadcast %4 : vector<1x256xf32> to vector<2x256xf32>
    %7 = arith.mulf %5, %6 : vector<2x256xf32>
    %8 = vector.extract_strided_slice %2 {offsets = [0, 1], sizes = [2, 1], strides = [1, 1]} : vector<2x4xf32> to vector<2x1xf32>
    %9 = vector.extract_strided_slice %1 {offsets = [1, 0], sizes = [1, 256], strides = [1, 1]} : vector<4x256xf32> to vector<1x256xf32>
    %10 = vector.broadcast %8 : vector<2x1xf32> to vector<2x256xf32>
    %11 = vector.broadcast %9 : vector<1x256xf32> to vector<2x256xf32>
    %12 = arith.mulf %10, %11 : vector<2x256xf32>
    %13 = arith.addf %7, %12 : vector<2x256xf32>
    %14 = vector.extract_strided_slice %2 {offsets = [0, 2], sizes = [2, 1], strides = [1, 1]} : vector<2x4xf32> to vector<2x1xf32>
    %15 = vector.extract_strided_slice %1 {offsets = [2, 0], sizes = [1, 256], strides = [1, 1]} : vector<4x256xf32> to vector<1x256xf32>
    %16 = vector.broadcast %14 : vector<2x1xf32> to vector<2x256xf32>
    %17 = vector.broadcast %15 : vector<1x256xf32> to vector<2x256xf32>
    %18 = arith.mulf %16, %17 : vector<2x256xf32>
    %19 = arith.addf %13, %18 : vector<2x256xf32>
    %20 = vector.extract_strided_slice %2 {offsets = [0, 3], sizes = [2, 1], strides = [1, 1]} : vector<2x4xf32> to vector<2x1xf32>
    %21 = vector.extract_strided_slice %1 {offsets = [3, 0], sizes = [1, 256], strides = [1, 1]} : vector<4x256xf32> to vector<1x256xf32>
    %22 = vector.broadcast %20 : vector<2x1xf32> to vector<2x256xf32>
    %23 = vector.broadcast %21 : vector<1x256xf32> to vector<2x256xf32>
    %24 = arith.mulf %22, %23 : vector<2x256xf32>
    %25 = arith.addf %19, %24 : vector<2x256xf32>
    %c0_4 = arith.constant 0 : index
    %c0_5 = arith.constant 0 : index
    %c0_6 = arith.constant 0 : index
    %26 = vector.load %arg4[%c0_4, %c0_5, %c0_6] : memref<1x2x256xf32, #tpu.memory_space<vmem>>, vector<1x2x256xf32>
    %27 = vector.shape_cast %26 : vector<1x2x256xf32> to vector<2x256xf32>
    %28 = vector.shape_cast %25 : vector<2x256xf32> to vector<1x2x256xf32>
    tpu.vector_store %arg4[%c0_4, %c0_5, %c0_6], %28 {strides = array<i32>} : memref<1x2x256xf32, #tpu.memory_space<vmem>>, vector<1x2x256xf32>,
    %cst = arith.constant dense<0.000000e+00> : vector<2xf32>
    %29 = vector.multi_reduction <add>, %25, %cst [1] : vector<2x256xf32> to vector<2xf32>
    %30 = vector.shape_cast %29 : vector<2xf32> to vector<2x1xf32>
    %31 = arith.mulf %25, %25 : vector<2x256xf32>
    %cst_7 = arith.constant dense<0.000000e+00> : vector<2xf32>
    %32 = vector.multi_reduction <add>, %31, %cst_7 [1] : vector<2x256xf32> to vector<2xf32>
    %33 = vector.shape_cast %32 : vector<2xf32> to vector<2x1xf32>
    %34 = tpu.concatenate %30, %33 in 1 : vector<2x1xf32>, vector<2x1xf32> -> vector<2x2xf32>
    %c0_8 = arith.constant 0 : index
    %c0_9 = arith.constant 0 : index
    %c0_10 = arith.constant 0 : index
    %c0_11 = arith.constant 0 : index
    %35 = vector.load %arg5[%c0_8, %c0_9, %c0_10, %c0_11] : memref<1x1x2x2xf32, #tpu.memory_space<vmem>>, vector<1x1x2x2xf32>
    %36 = vector.shape_cast %35 : vector<1x1x2x2xf32> to vector<2x2xf32>
    %37 = vector.shape_cast %34 : vector<2x2xf32> to vector<1x1x2x2xf32>
    tpu.vector_store %arg5[%c0_8, %c0_9, %c0_10, %c0_11], %37 {strides = array<i32>} : memref<1x1x2x2xf32, #tpu.memory_space<vmem>>, vector<1x1x2x2xf32>,
    return
  }
  func.func @transform_0(%arg0: i32, %arg1: i32) -> (i32, i32, i32) {
    %c0_i32 = arith.constant 0 : i32
    %c0_i32_0 = arith.constant 0 : i32
    return %arg0, %c0_i32, %arg1 : i32, i32, i32
  }
  func.func @transform_1(%arg0: i32, %arg1: i32) -> (i32, i32) {
    %c0_i32 = arith.constant 0 : i32
    %c0_i32_0 = arith.constant 0 : i32
    %c0_i32_1 = arith.constant 0 : i32
    return %c0_i32, %c0_i32_0 : i32, i32
  }
  func.func @transform_2(%arg0: i32, %arg1: i32) -> (i32, i32, i32) {
    %c0_i32 = arith.constant 0 : i32
    %c0_i32_0 = arith.constant 0 : i32
    return %arg0, %c0_i32, %arg1 : i32, i32, i32
  }
  func.func @transform_3(%arg0: i32, %arg1: i32) -> (i32, i32, i32, i32) {
    %c0_i32 = arith.constant 0 : i32
    %c0_i32_0 = arith.constant 0 : i32
    %c0_i32_1 = arith.constant 0 : i32
    return %arg0, %arg1, %c0_i32, %c0_i32_0 : i32, i32, i32, i32
  }
}

module attributes {stable_mosaic.version = 11 : i64} {
  func.func @_pass2_kernel(%arg0: i32, %arg1: i32, %arg2: memref<1x2x256xf32, #tpu.memory_space<vmem>>, %arg3: memref<2x1xf32, #tpu.memory_space<vmem>>, %arg4: memref<2x1xf32, #tpu.memory_space<vmem>>, %arg5: memref<4x2xf32, #tpu.memory_space<vmem>>, %arg6: memref<1x1x4x2xf32, #tpu.memory_space<vmem>>) attributes {dimension_semantics = [#tpu.dimension_semantics<parallel>, #tpu.dimension_semantics<parallel>], iteration_bounds = array<i64: 2, 1>, scalar_prefetch = 0 : i64, scratch_operands = 0 : i64, tpu.core_type = #tpu.core_type<tc>, window_params = [{transform_indices = @transform_0, window_bounds = array<i64: 1, 2, 256>}, {pipeline_mode = #tpu.pipeline_mode<synchronous>, transform_indices = @transform_1, window_bounds = array<i64: 2, 1>}, {pipeline_mode = #tpu.pipeline_mode<synchronous>, transform_indices = @transform_2, window_bounds = array<i64: 2, 1>}, {pipeline_mode = #tpu.pipeline_mode<synchronous>, transform_indices = @transform_3, window_bounds = array<i64: 4, 2>}, {transform_indices = @transform_4, window_bounds = array<i64: 1, 1, 4, 2>}]} {
    %c0 = arith.constant 0 : index
    %c0_0 = arith.constant 0 : index
    %c0_1 = arith.constant 0 : index
    %0 = vector.load %arg2[%c0, %c0_0, %c0_1] : memref<1x2x256xf32, #tpu.memory_space<vmem>>, vector<1x2x256xf32>
    %1 = vector.shape_cast %0 : vector<1x2x256xf32> to vector<2x256xf32>
    %c0_2 = arith.constant 0 : index
    %c0_3 = arith.constant 0 : index
    %2 = vector.load %arg3[%c0_2, %c0_3] : memref<2x1xf32, #tpu.memory_space<vmem>>, vector<2x1xf32>
    %3 = vector.broadcast %2 : vector<2x1xf32> to vector<2x256xf32>
    %4 = arith.mulf %1, %3 : vector<2x256xf32>
    %c0_4 = arith.constant 0 : index
    %c0_5 = arith.constant 0 : index
    %5 = vector.load %arg4[%c0_4, %c0_5] : memref<2x1xf32, #tpu.memory_space<vmem>>, vector<2x1xf32>
    %6 = vector.broadcast %5 : vector<2x1xf32> to vector<2x256xf32>
    %7 = arith.addf %4, %6 : vector<2x256xf32>
    %cst = arith.constant 0.000000e+00 : f32
    %8 = vector.broadcast %cst : f32 to vector<2x256xf32>
    %9 = arith.maximumf %7, %8 : vector<2x256xf32>
    %c0_6 = arith.constant 0 : index
    %c0_7 = arith.constant 0 : index
    %10 = vector.load %arg5[%c0_6, %c0_7] : memref<4x2xf32, #tpu.memory_space<vmem>>, vector<4x2xf32>
    %11 = vector.extract_strided_slice %10 {offsets = [0, 0], sizes = [4, 1], strides = [1, 1]} : vector<4x2xf32> to vector<4x1xf32>
    %12 = vector.extract_strided_slice %9 {offsets = [0, 0], sizes = [1, 256], strides = [1, 1]} : vector<2x256xf32> to vector<1x256xf32>
    %13 = vector.broadcast %11 : vector<4x1xf32> to vector<4x256xf32>
    %14 = vector.broadcast %12 : vector<1x256xf32> to vector<4x256xf32>
    %15 = arith.mulf %13, %14 : vector<4x256xf32>
    %16 = vector.extract_strided_slice %10 {offsets = [0, 1], sizes = [4, 1], strides = [1, 1]} : vector<4x2xf32> to vector<4x1xf32>
    %17 = vector.extract_strided_slice %9 {offsets = [1, 0], sizes = [1, 256], strides = [1, 1]} : vector<2x256xf32> to vector<1x256xf32>
    %18 = vector.broadcast %16 : vector<4x1xf32> to vector<4x256xf32>
    %19 = vector.broadcast %17 : vector<1x256xf32> to vector<4x256xf32>
    %20 = arith.mulf %18, %19 : vector<4x256xf32>
    %21 = arith.addf %15, %20 : vector<4x256xf32>
    %cst_8 = arith.constant dense<0.000000e+00> : vector<4xf32>
    %22 = vector.multi_reduction <add>, %21, %cst_8 [1] : vector<4x256xf32> to vector<4xf32>
    %23 = vector.shape_cast %22 : vector<4xf32> to vector<4x1xf32>
    %24 = arith.mulf %21, %21 : vector<4x256xf32>
    %cst_9 = arith.constant dense<0.000000e+00> : vector<4xf32>
    %25 = vector.multi_reduction <add>, %24, %cst_9 [1] : vector<4x256xf32> to vector<4xf32>
    %26 = vector.shape_cast %25 : vector<4xf32> to vector<4x1xf32>
    %27 = tpu.concatenate %23, %26 in 1 : vector<4x1xf32>, vector<4x1xf32> -> vector<4x2xf32>
    %c0_10 = arith.constant 0 : index
    %c0_11 = arith.constant 0 : index
    %c0_12 = arith.constant 0 : index
    %c0_13 = arith.constant 0 : index
    %28 = vector.load %arg6[%c0_10, %c0_11, %c0_12, %c0_13] : memref<1x1x4x2xf32, #tpu.memory_space<vmem>>, vector<1x1x4x2xf32>
    %29 = vector.shape_cast %28 : vector<1x1x4x2xf32> to vector<4x2xf32>
    %30 = vector.shape_cast %27 : vector<4x2xf32> to vector<1x1x4x2xf32>
    tpu.vector_store %arg6[%c0_10, %c0_11, %c0_12, %c0_13], %30 {strides = array<i32>} : memref<1x1x4x2xf32, #tpu.memory_space<vmem>>, vector<1x1x4x2xf32>,
    return
  }
  func.func @transform_0(%arg0: i32, %arg1: i32) -> (i32, i32, i32) {
    %c0_i32 = arith.constant 0 : i32
    %c0_i32_0 = arith.constant 0 : i32
    return %arg0, %c0_i32, %arg1 : i32, i32, i32
  }
  func.func @transform_1(%arg0: i32, %arg1: i32) -> (i32, i32) {
    %c0_i32 = arith.constant 0 : i32
    %c0_i32_0 = arith.constant 0 : i32
    %c0_i32_1 = arith.constant 0 : i32
    return %c0_i32, %c0_i32_0 : i32, i32
  }
  func.func @transform_2(%arg0: i32, %arg1: i32) -> (i32, i32) {
    %c0_i32 = arith.constant 0 : i32
    %c0_i32_0 = arith.constant 0 : i32
    %c0_i32_1 = arith.constant 0 : i32
    return %c0_i32, %c0_i32_0 : i32, i32
  }
  func.func @transform_3(%arg0: i32, %arg1: i32) -> (i32, i32) {
    %c0_i32 = arith.constant 0 : i32
    %c0_i32_0 = arith.constant 0 : i32
    %c0_i32_1 = arith.constant 0 : i32
    return %c0_i32, %c0_i32_0 : i32, i32
  }
  func.func @transform_4(%arg0: i32, %arg1: i32) -> (i32, i32, i32, i32) {
    %c0_i32 = arith.constant 0 : i32
    %c0_i32_0 = arith.constant 0 : i32
    %c0_i32_1 = arith.constant 0 : i32
    return %arg0, %arg1, %c0_i32, %c0_i32_0 : i32, i32, i32, i32
  }
}

module attributes {stable_mosaic.version = 11 : i64} {
  func.func @_pass3_kernel(%arg0: i32, %arg1: i32, %arg2: memref<1x4x256xf32, #tpu.memory_space<vmem>>, %arg3: memref<1x2x256xf32, #tpu.memory_space<vmem>>, %arg4: memref<2x1xf32, #tpu.memory_space<vmem>>, %arg5: memref<2x1xf32, #tpu.memory_space<vmem>>, %arg6: memref<4x2xf32, #tpu.memory_space<vmem>>, %arg7: memref<4x1xf32, #tpu.memory_space<vmem>>, %arg8: memref<4x1xf32, #tpu.memory_space<vmem>>, %arg9: memref<1xf32, #tpu.memory_space<smem>>, %arg10: memref<1x4x256xf32, #tpu.memory_space<vmem>>) attributes {dimension_semantics = [#tpu.dimension_semantics<parallel>, #tpu.dimension_semantics<parallel>], iteration_bounds = array<i64: 2, 1>, scalar_prefetch = 0 : i64, scratch_operands = 0 : i64, tpu.core_type = #tpu.core_type<tc>, window_params = [{transform_indices = @transform_0, window_bounds = array<i64: 1, 4, 256>}, {transform_indices = @transform_1, window_bounds = array<i64: 1, 2, 256>}, {pipeline_mode = #tpu.pipeline_mode<synchronous>, transform_indices = @transform_2, window_bounds = array<i64: 2, 1>}, {pipeline_mode = #tpu.pipeline_mode<synchronous>, transform_indices = @transform_3, window_bounds = array<i64: 2, 1>}, {pipeline_mode = #tpu.pipeline_mode<synchronous>, transform_indices = @transform_4, window_bounds = array<i64: 4, 2>}, {pipeline_mode = #tpu.pipeline_mode<synchronous>, transform_indices = @transform_5, window_bounds = array<i64: 4, 1>}, {pipeline_mode = #tpu.pipeline_mode<synchronous>, transform_indices = @transform_6, window_bounds = array<i64: 4, 1>}, {transform_indices = @transform_7, window_bounds = array<i64: 1>}, {transform_indices = @transform_8, window_bounds = array<i64: 1, 4, 256>}]} {
    %c0 = arith.constant 0 : index
    %0 = memref.load %arg9[%c0] : memref<1xf32, #tpu.memory_space<smem>>
    %c0_0 = arith.constant 0 : index
    %c0_1 = arith.constant 0 : index
    %c0_2 = arith.constant 0 : index
    %1 = vector.load %arg2[%c0_0, %c0_1, %c0_2] : memref<1x4x256xf32, #tpu.memory_space<vmem>>, vector<1x4x256xf32>
    %2 = vector.shape_cast %1 : vector<1x4x256xf32> to vector<4x256xf32>
    %c0_3 = arith.constant 0 : index
    %c0_4 = arith.constant 0 : index
    %c0_5 = arith.constant 0 : index
    %3 = vector.load %arg3[%c0_3, %c0_4, %c0_5] : memref<1x2x256xf32, #tpu.memory_space<vmem>>, vector<1x2x256xf32>
    %4 = vector.shape_cast %3 : vector<1x2x256xf32> to vector<2x256xf32>
    %c0_6 = arith.constant 0 : index
    %c0_7 = arith.constant 0 : index
    %5 = vector.load %arg4[%c0_6, %c0_7] : memref<2x1xf32, #tpu.memory_space<vmem>>, vector<2x1xf32>
    %6 = vector.broadcast %5 : vector<2x1xf32> to vector<2x256xf32>
    %7 = arith.mulf %4, %6 : vector<2x256xf32>
    %c0_8 = arith.constant 0 : index
    %c0_9 = arith.constant 0 : index
    %8 = vector.load %arg5[%c0_8, %c0_9] : memref<2x1xf32, #tpu.memory_space<vmem>>, vector<2x1xf32>
    %9 = vector.broadcast %8 : vector<2x1xf32> to vector<2x256xf32>
    %10 = arith.addf %7, %9 : vector<2x256xf32>
    %cst = arith.constant 0.000000e+00 : f32
    %11 = vector.broadcast %cst : f32 to vector<2x256xf32>
    %12 = arith.maximumf %10, %11 : vector<2x256xf32>
    %c0_10 = arith.constant 0 : index
    %c0_11 = arith.constant 0 : index
    %13 = vector.load %arg6[%c0_10, %c0_11] : memref<4x2xf32, #tpu.memory_space<vmem>>, vector<4x2xf32>
    %14 = vector.extract_strided_slice %13 {offsets = [0, 0], sizes = [4, 1], strides = [1, 1]} : vector<4x2xf32> to vector<4x1xf32>
    %15 = vector.extract_strided_slice %12 {offsets = [0, 0], sizes = [1, 256], strides = [1, 1]} : vector<2x256xf32> to vector<1x256xf32>
    %16 = vector.broadcast %14 : vector<4x1xf32> to vector<4x256xf32>
    %17 = vector.broadcast %15 : vector<1x256xf32> to vector<4x256xf32>
    %18 = arith.mulf %16, %17 : vector<4x256xf32>
    %19 = vector.extract_strided_slice %13 {offsets = [0, 1], sizes = [4, 1], strides = [1, 1]} : vector<4x2xf32> to vector<4x1xf32>
    %20 = vector.extract_strided_slice %12 {offsets = [1, 0], sizes = [1, 256], strides = [1, 1]} : vector<2x256xf32> to vector<1x256xf32>
    %21 = vector.broadcast %19 : vector<4x1xf32> to vector<4x256xf32>
    %22 = vector.broadcast %20 : vector<1x256xf32> to vector<4x256xf32>
    %23 = arith.mulf %21, %22 : vector<4x256xf32>
    %24 = arith.addf %18, %23 : vector<4x256xf32>
    %c0_12 = arith.constant 0 : index
    %c0_13 = arith.constant 0 : index
    %25 = vector.load %arg7[%c0_12, %c0_13] : memref<4x1xf32, #tpu.memory_space<vmem>>, vector<4x1xf32>
    %26 = vector.broadcast %25 : vector<4x1xf32> to vector<4x256xf32>
    %27 = arith.mulf %24, %26 : vector<4x256xf32>
    %c0_14 = arith.constant 0 : index
    %c0_15 = arith.constant 0 : index
    %28 = vector.load %arg8[%c0_14, %c0_15] : memref<4x1xf32, #tpu.memory_space<vmem>>, vector<4x1xf32>
    %29 = vector.broadcast %28 : vector<4x1xf32> to vector<4x256xf32>
    %30 = arith.addf %27, %29 : vector<4x256xf32>
    %cst_16 = arith.constant 0.000000e+00 : f32
    %31 = vector.broadcast %cst_16 : f32 to vector<4x256xf32>
    %32 = arith.maximumf %30, %31 : vector<4x256xf32>
    %33 = vector.broadcast %0 : f32 to vector<4x256xf32>
    %34 = arith.mulf %33, %2 : vector<4x256xf32>
    %cst_17 = arith.constant 1.000000e+00 : f32
    %35 = arith.subf %cst_17, %0 : f32
    %36 = vector.broadcast %35 : f32 to vector<4x256xf32>
    %37 = arith.mulf %36, %32 : vector<4x256xf32>
    %38 = arith.addf %34, %37 : vector<4x256xf32>
    %c0_18 = arith.constant 0 : index
    %c0_19 = arith.constant 0 : index
    %c0_20 = arith.constant 0 : index
    %39 = vector.load %arg10[%c0_18, %c0_19, %c0_20] : memref<1x4x256xf32, #tpu.memory_space<vmem>>, vector<1x4x256xf32>
    %40 = vector.shape_cast %39 : vector<1x4x256xf32> to vector<4x256xf32>
    %41 = vector.shape_cast %38 : vector<4x256xf32> to vector<1x4x256xf32>
    tpu.vector_store %arg10[%c0_18, %c0_19, %c0_20], %41 {strides = array<i32>} : memref<1x4x256xf32, #tpu.memory_space<vmem>>, vector<1x4x256xf32>,
    return
  }
  func.func @transform_0(%arg0: i32, %arg1: i32) -> (i32, i32, i32) {
    %c0_i32 = arith.constant 0 : i32
    %c0_i32_0 = arith.constant 0 : i32
    return %arg0, %c0_i32, %arg1 : i32, i32, i32
  }
  func.func @transform_1(%arg0: i32, %arg1: i32) -> (i32, i32, i32) {
    %c0_i32 = arith.constant 0 : i32
    %c0_i32_0 = arith.constant 0 : i32
    return %arg0, %c0_i32, %arg1 : i32, i32, i32
  }
  func.func @transform_2(%arg0: i32, %arg1: i32) -> (i32, i32) {
    %c0_i32 = arith.constant 0 : i32
    %c0_i32_0 = arith.constant 0 : i32
    %c0_i32_1 = arith.constant 0 : i32
    return %c0_i32, %c0_i32_0 : i32, i32
  }
  func.func @transform_3(%arg0: i32, %arg1: i32) -> (i32, i32) {
    %c0_i32 = arith.constant 0 : i32
    %c0_i32_0 = arith.constant 0 : i32
    %c0_i32_1 = arith.constant 0 : i32
    return %c0_i32, %c0_i32_0 : i32, i32
  }
  func.func @transform_4(%arg0: i32, %arg1: i32) -> (i32, i32) {
    %c0_i32 = arith.constant 0 : i32
    %c0_i32_0 = arith.constant 0 : i32
    %c0_i32_1 = arith.constant 0 : i32
    return %c0_i32, %c0_i32_0 : i32, i32
  }
  func.func @transform_5(%arg0: i32, %arg1: i32) -> (i32, i32) {
    %c0_i32 = arith.constant 0 : i32
    %c0_i32_0 = arith.constant 0 : i32
    %c0_i32_1 = arith.constant 0 : i32
    return %c0_i32, %c0_i32_0 : i32, i32
  }
  func.func @transform_6(%arg0: i32, %arg1: i32) -> (i32, i32) {
    %c0_i32 = arith.constant 0 : i32
    %c0_i32_0 = arith.constant 0 : i32
    %c0_i32_1 = arith.constant 0 : i32
    return %c0_i32, %c0_i32_0 : i32, i32
  }
  func.func @transform_7(%arg0: i32, %arg1: i32) -> i32 {
    %c0_i32 = arith.constant 0 : i32
    %c0_i32_0 = arith.constant 0 : i32
    return %c0_i32 : i32
  }
  func.func @transform_8(%arg0: i32, %arg1: i32) -> (i32, i32, i32) {
    %c0_i32 = arith.constant 0 : i32
    %c0_i32_0 = arith.constant 0 : i32
    return %arg0, %c0_i32, %arg1 : i32, i32, i32
  }
}

</mosaic_0001>

<llo_original>
// kernel: information_bottleneck.3
$region0: #{information_bottleneck.3}
  #allocation0 [shape = 'u32[]', space=smem, size = 0x4, offset = 0x4, fixed_abs, tag = 'smem constant byte address 0x4 - core index']
  #allocation1 [shape = 'u32[72,128]{1,0:T(1,128)}', space=vmem, size = 0x9000, scoped, tag = 'internal scratch']
  %s0 = inlined_call_operand.vmem [shape: f32[2,4,256], index: 0, kind: input, shape index: {}]
  %s1 = inlined_call_operand.vmem [shape: f32[2,4], index: 1, kind: input, shape index: {}]
  %s2 = inlined_call_operand.vmem [shape: f32[2,2,256], index: 2, kind: output, shape index: {0}]
  %s3 = inlined_call_operand.vmem [shape: f32[2,1,2,2], index: 3, kind: output, shape index: {1}]
  %4 = xla_tuple %s2, %s3
  %s5 = sld [smem:[#allocation0]]
  $region49: #{information_bottleneck.3} parent=0
    _
  %s7 = ssub.s32 1, %s5
  %s8 = scalar_select 0, %s7, %s5
  loop: start=0, step=1, limit=4
  $region2: #{information_bottleneck.3} parent=0 // loop_pre_header
    _
  $region3: #{information_bottleneck.3} parent=0 // loop_header
    %s10 = sphi 0, %s14
    %p11 = scmp.ge.s32.totalorder %s10, 4
    %s17 = sphi 0, %s29
    %s18 = sphi 0, %s25
    %s19 = sphi 0, %s17
    %s20 = sphi 0, %s18
    %s21 = sphi 0, %s19
    %s22 = sphi 0, %s20
    %s34 = sphi 0, %s36
    %s37 = sphi 0, %s34
    %s38 = sphi 0, %s37
    %s54 = sphi 0, %s38
    %s58 = sphi 0, %s58
    %s60 = sphi 0, %s58
    %s61 = sphi 0, %s60
    %s75 = sphi 0, %s61
    %s83 = sphi 0, %s85
    %s86 = sphi 0, %s83
    %s87 = sphi 0, %s86
    %s103 = sphi 0, %s87
    %s111 = sphi 0, %s113
    %s114 = sphi 0, %s111
    %s115 = sphi 0, %s114
    %s131 = sphi 0, %s115
  $region4: #{information_bottleneck.3} parent=0 // loop_header_branch
    %13 = sbr.rel (%p11) target = $region8
  $region5: #{information_bottleneck.3} parent=0 // loop_body
    %s15 = ssub.s32 %s10, 1
    %s16 = ssub.s32 %s10, 2
    %s23 = sadd.s32 1, %s18
    %p24 = scmp.ge.s32.totalorder %s23, 1
    %s25 = scalar_select %p24, 0, %s23
    %s26 = sadd.s32 1, %s17
    %s27 = scalar_select %p24, %s26, %s17
    %p28 = scmp.ge.s32.totalorder %s27, 2
    %s29 = scalar_select %p28, 0, %s27
    %s30 = ssub.s32 %s17, %s29
    %s31 = ssub.s32 %s18, %s25
    %s32 = sor.u32 %s30, %s31
    %p33 = scmp.eq.s32.totalorder %s32, 0
    %s35 = sadd.s32 %s34, 1
    %s36 = scalar_select %p33, %s34, %s35
    %p39 = pneg %p33
    %p40 = scmp.eq.s32.totalorder %s10, 1
    %p41 = por %p39, %p40
    %p42 = scmp.ne.s32.totalorder %s34, %s37
    %p43 = scmp.eq.s32.totalorder %s10, 0
    %p44 = por %p42, %p43
    %p45 = scmp.ne.s32.totalorder %s34, %s37
    %p46 = scmp.eq.s32.totalorder %s15, 1
    %p47 = por %p45, %p46
    %p48 = scmp.ne.s32.totalorder %s37, %s38
    %p49 = scmp.eq.s32.totalorder %s15, 0
    %p50 = por %p48, %p49
    %p51 = scmp.ne.s32.totalorder %s37, %s38
    %p52 = scmp.eq.s32.totalorder %s16, 1
    %p53 = por %p51, %p52
    %p55 = scmp.ne.s32.totalorder %s38, %s54
    %p56 = scmp.eq.s32.totalorder %s16, 0
    %p57 = por %p55, %p56
    %s59 = sadd.s32 %s58, 1
    %p62 = scmp.eq.s32.totalorder %s10, 1
    %p63 = scmp.ne.s32.totalorder %s58, %s60
    %p64 = scmp.eq.s32.totalorder %s10, 0
    %p65 = por %p63, %p64
    %p66 = scmp.ne.s32.totalorder %s58, %s60
    %p67 = scmp.eq.s32.totalorder %s15, 1
    %p68 = por %p66, %p67
    %p69 = scmp.ne.s32.totalorder %s60, %s61
    %p70 = scmp.eq.s32.totalorder %s15, 0
    %p71 = por %p69, %p70
    %p72 = scmp.ne.s32.totalorder %s60, %s61
    %p73 = scmp.eq.s32.totalorder %s16, 1
    %p74 = por %p72, %p73
    %p76 = scmp.ne.s32.totalorder %s61, %s75
    %p77 = scmp.eq.s32.totalorder %s16, 0
    %p78 = por %p76, %p77
    %s79 = ssub.s32 %s17, %s29
    %s80 = ssub.s32 %s18, %s25
    %s81 = sor.u32 %s79, %s80
    %p82 = scmp.eq.s32.totalorder %s81, 0
    %s84 = sadd.s32 %s83, 1
    %s85 = scalar_select %p82, %s83, %s84
    %p88 = pneg %p82
    %p89 = scmp.eq.s32.totalorder %s10, 1
    %p90 = por %p88, %p89
    %p91 = scmp.ne.s32.totalorder %s83, %s86
    %p92 = scmp.eq.s32.totalorder %s10, 0
    %p93 = por %p91, %p92
    %p94 = scmp.ne.s32.totalorder %s83, %s86
    %p95 = scmp.eq.s32.totalorder %s15, 1
    %p96 = por %p94, %p95
    %p97 = scmp.ne.s32.totalorder %s86, %s87
    %p98 = scmp.eq.s32.totalorder %s15, 0
    %p99 = por %p97, %p98
    %p100 = scmp.ne.s32.totalorder %s86, %s87
    %p101 = scmp.eq.s32.totalorder %s16, 1
    %p102 = por %p100, %p101
    %p104 = scmp.ne.s32.totalorder %s87, %s103
    %p105 = scmp.eq.s32.totalorder %s16, 0
    %p106 = por %p104, %p105
    %s107 = ssub.s32 %s17, %s29
    %s108 = ssub.s32 %s18, %s25
    %s109 = sor.u32 %s107, %s108
    %p110 = scmp.eq.s32.totalorder %s109, 0
    %s112 = sadd.s32 %s111, 1
    %s113 = scalar_select %p110, %s111, %s112
    %p116 = pneg %p110
    %p117 = scmp.eq.s32.totalorder %s10, 1
    %p118 = por %p116, %p117
    %p119 = scmp.ne.s32.totalorder %s111, %s114
    %p120 = scmp.eq.s32.totalorder %s10, 0
    %p121 = por %p119, %p120
    %p122 = scmp.ne.s32.totalorder %s111, %s114
    %p123 = scmp.eq.s32.totalorder %s15, 1
    %p124 = por %p122, %p123
    %p125 = scmp.ne.s32.totalorder %s114, %s115
    %p126 = scmp.eq.s32.totalorder %s15, 0
    %p127 = por %p125, %p126
    %p128 = scmp.ne.s32.totalorder %s114, %s115
    %p129 = scmp.eq.s32.totalorder %s16, 1
    %p130 = por %p128, %p129
    %p132 = scmp.ne.s32.totalorder %s115, %s131
    %p133 = scmp.eq.s32.totalorder %s16, 0
    %p134 = por %p132, %p133
    %p135 = scmp.le.s32.totalorder 1, %s10
    %p136 = scmp.lt.s32.totalorder %s10, 3
    %p137 = pnand %p135, %p136
    %p138 = pneg %p137
    // Predicated region
    $region9: #{information_bottleneck.3} parent=5 // pred_check
      _
    $region10: #{information_bottleneck.3} parent=5 // pred_check_branch
      %140 = sbr.rel (%p137) target = $region12
    $region11: #{information_bottleneck.3} parent=5 // pred_region
      %s141 = ssub.s32 %s10, 1
      // Predicated region
      $region13: #{information_bottleneck.3} parent=11 // pred_check
        %p142 = pneg %p71
      $region14: #{information_bottleneck.3} parent=11 // pred_check_branch
        %144 = sbr.rel (%p142) target = $region16
      $region15: #{information_bottleneck.3} parent=11 // pred_region
        _
      $region16: #{information_bottleneck.3} parent=11 // pred_fallthru
        _
    $region12: #{information_bottleneck.3} parent=5 // pred_fallthru
      _
    %p145 = scmp.lt.s32.totalorder %s10, 2
    // Predicated region
    $region17: #{information_bottleneck.3} parent=5 // pred_check
      %p146 = pneg %p145
    $region18: #{information_bottleneck.3} parent=5 // pred_check_branch
      %148 = sbr.rel (%p146) target = $region20
    $region19: #{information_bottleneck.3} parent=5 // pred_region
      // Predicated region
      $region21: #{information_bottleneck.3} parent=19 // pred_check
        %p149 = pneg %p44
      $region22: #{information_bottleneck.3} parent=19 // pred_check_branch
        %151 = sbr.rel (%p149) target = $region24
      $region23: #{information_bottleneck.3} parent=19 // pred_region
        %s152 = smul.u32 2, %s18
        %p153 = scmp.lt.s32.totalorder %s17, 1
        %s154 = scalar_select %p153, %s17, 1
        %p155 = scmp.lt.s32.totalorder %s152, 1
        %s156 = scalar_select %p155, %s152, 1
        %s157 = smul.addr %s154, 2
        %s158 = sadd.s32 %s156, %s157
        %s159 = smul.addr %s158, 4
        %s160 = scalar_lea.vmem %s0, %s159
        %s161 = smul.u32 2, %s18
      $region24: #{information_bottleneck.3} parent=19 // pred_fallthru
        _
    $region20: #{information_bottleneck.3} parent=5 // pred_fallthru
      _
    %p162 = scmp.le.s32.totalorder 1, %s10
    %p163 = scmp.lt.s32.totalorder %s10, 3
    %p164 = pnand %p162, %p163
    %p165 = pneg %p164
    // Predicated region
    $region25: #{information_bottleneck.3} parent=5 // pred_check
      _
    $region26: #{information_bottleneck.3} parent=5 // pred_check_branch
      %167 = sbr.rel (%p164) target = $region28
    $region27: #{information_bottleneck.3} parent=5 // pred_region
      %s168 = ssub.s32 %s10, 1
      %s169 = smul.u32 2, %s20
      %p170 = scmp.lt.s32.totalorder %s19, 1
      %s171 = scalar_select %p170, %s19, 1
      %p172 = scmp.lt.s32.totalorder %s169, 1
      %s173 = scalar_select %p172, %s169, 1
      %s174 = smul.addr %s171, 2
      %s175 = sadd.s32 %s173, %s174
      %s176 = smul.addr %s175, 4
      %s177 = scalar_lea.vmem %s0, %s176
      %p178 = pneg %p50
      %p179 = pneg %p47
      %p180 = pneg %p71
      %p181 = pneg %p68
      %p182 = pneg %p99
      %p183 = pneg %p96
      %s184 = smul.u32 2, %s20
      %p185 = scmp.lt.s32.totalorder %s19, 1
      %s186 = scalar_select %p185, %s19, 1
      %p187 = scmp.lt.s32.totalorder %s184, 1
      %s188 = scalar_select %p187, %s184, 1
      %s189 = smul.addr %s186, 2
      %s190 = sadd.s32 %s188, %s189
      %s191 = smul.addr %s190, 2
      %s192 = scalar_lea.vmem %s2, %s191
      %p193 = pneg %p127
      %p194 = pneg %p124
      %p195 = scmp.lt.s32.totalorder %s19, 1
      %s196 = scalar_select %p195, %s19, 1
      %p197 = scmp.lt.s32.totalorder %s20, 0
      %s198 = scalar_select %p197, %s20, 0
      %s199 = sadd.s32 %s198, %s196
      %s200 = smul.addr %s199, 2
      %s201 = scalar_lea.vmem %s3, %s200
      %s202 = smul.u32 2, %s20
      %p203 = scmp.lt.s32.totalorder %s19, 1
      %s204 = scalar_select %p203, %s19, 1
      %p205 = scmp.lt.s32.totalorder %s202, 1
      %s206 = scalar_select %p205, %s202, 1
      %s207 = smul.addr %s204, 2
      %s208 = sadd.s32 %s206, %s207
      %s209 = smul.addr %s208, 4
      %s210 = scalar_lea.vmem %s0, %s209
      %s211 = smul.u32 2, %s20
      %s212 = smul.u32 2, %s20
      %p213 = scmp.lt.s32.totalorder %s19, 1
      %s214 = scalar_select %p213, %s19, 1
      %p215 = scmp.lt.s32.totalorder %s212, 1
      %s216 = scalar_select %p215, %s212, 1
      %s217 = smul.addr %s214, 2
      %s218 = sadd.s32 %s216, %s217
      %s219 = smul.addr %s218, 2
      %s220 = scalar_lea.vmem %s2, %s219
      %s221 = smul.u32 2, %s20
      %p222 = scmp.lt.s32.totalorder %s19, 1
      %s223 = scalar_select %p222, %s19, 1
      %p224 = scmp.lt.s32.totalorder %s20, 0
      %s225 = scalar_select %p224, %s20, 0
      %s226 = sadd.s32 %s225, %s223
      %s227 = smul.addr %s226, 2
      %s228 = scalar_lea.vmem %s3, %s227
      %v229 = vld [vmem:[%s210] sm:$0xff]
      %v230 = vld [vmem:[%s1] sm:$0x3]
      %232 = vset.pattern.permute.xlu0 0
      %233 = vperm.xlu0 %232, %v230
      %v234 = vpop.permute.xlu0 %233
      %v237 = vperm.slane %v229, 0
      %v238 = vperm.slane %v229, 4
      %v241 = vperm.slane %v237, 0
      %v242 = vperm.slane %v238, 0
      %v243 = vmul.f32 %v234, %v241
      %v244 = vmul.f32 %v234, %v242
      %245 = vset.pattern.permute.xlu0 1
      %246 = vperm.xlu0 %245, %v230
      %v247 = vpop.permute.xlu0 %246
      %v249 = vperm.slane %v229, 1
      %v250 = vperm.slane %v229, 5
      %v253 = vperm.slane %v249, 1
      %v254 = vperm.slane %v250, 1
      %v255 = vmul.f32 %v247, %v253
      %v256 = vmul.f32 %v247, %v254
      %v257 = vadd.f32 %v243, %v255
      %v258 = vadd.f32 %v244, %v256
      %259 = vset.pattern.permute.xlu0 2
      %260 = vperm.xlu0 %259, %v230
      %v261 = vpop.permute.xlu0 %260
      %v263 = vperm.slane %v229, 2
      %v264 = vperm.slane %v229, 6
      %v267 = vperm.slane %v263, 2
      %v268 = vperm.slane %v264, 2
      %v269 = vmul.f32 %v261, %v267
      %v270 = vmul.f32 %v261, %v268
      %v271 = vadd.f32 %v257, %v269
      %v272 = vadd.f32 %v258, %v270
      %273 = vset.pattern.permute.xlu0 3
      %274 = vperm.xlu0 %273, %v230
      %v275 = vpop.permute.xlu0 %274
      %v277 = vperm.slane %v229, 3
      %v278 = vperm.slane %v229, 7
      %v281 = vperm.slane %v277, 3
      %v282 = vperm.slane %v278, 3
      %v283 = vmul.f32 %v275, %v281
      %v284 = vmul.f32 %v275, %v282
      %v285 = vadd.f32 %v271, %v283
      %v286 = vadd.f32 %v272, %v284
      %v289 = vrot.slane %v286, 6
      %vm290 = vcmask 1041408
      %v291 = vsel %vm290, %v285, %v289
      %293 = vst [vmem:[%s220] sm:$0xf] %v291
      %v294 = vsel %vm290, %v285, 0.0
      %v295 = vsel %vm290, %v286, 0.0
      %v296 = vadd.f32 %v294, %v295
      %297 = vadd.xlane.f32.xlu0 %v296
      %v298 = vpop.xlane.xlu0 %297
      %v299 = vmul.f32 %v285, %v285
      %v300 = vmul.f32 %v286, %v286
      %v301 = vsel %vm290, %v299, 0.0
      %v302 = vsel %vm290, %v300, 0.0
      %v303 = vadd.f32 %v301, %v302
      %304 = vadd.xlane.f32.xlu0 %v303
      %v305 = vpop.xlane.xlu0 %304
      %vm306 = vcmask 7168
      %v307 = vsel %vm306, %v298, %v305
      %vm308 = vcmask 9216
      %309 = vst.msk [vmem:[%s228] sm:$0x3] %vm308, %v307
      %s310 = smul.u32 2, %s20
      %p311 = scmp.lt.s32.totalorder %s19, 1
      %s312 = scalar_select %p311, %s19, 1
      %p313 = scmp.lt.s32.totalorder %s310, 1
      %s314 = scalar_select %p313, %s310, 1
      %s315 = smul.addr %s312, 2
      %s316 = sadd.s32 %s314, %s315
      %s317 = smul.addr %s316, 2
      %s318 = scalar_lea.vmem %s2, %s317
      %p319 = scmp.lt.s32.totalorder %s19, 1
      %s320 = scalar_select %p319, %s19, 1
      %p321 = scmp.lt.s32.totalorder %s20, 0
      %s322 = scalar_select %p321, %s20, 0
      %s323 = sadd.s32 %s322, %s320
      %s324 = smul.addr %s323, 2
      %s325 = scalar_lea.vmem %s3, %s324
      // Predicated region
      $region29: #{information_bottleneck.3} parent=27 // pred_check
        %p326 = pneg %p96
      $region30: #{information_bottleneck.3} parent=27 // pred_check_branch
        %328 = sbr.rel (%p326) target = $region32
      $region31: #{information_bottleneck.3} parent=27 // pred_region
        %s329 = smul.u32 2, %s20
      $region32: #{information_bottleneck.3} parent=27 // pred_fallthru
        _
      // Predicated region
      $region33: #{information_bottleneck.3} parent=27 // pred_check
        %p330 = pneg %p124
      $region34: #{information_bottleneck.3} parent=27 // pred_check_branch
        %332 = sbr.rel (%p330) target = $region36
      $region35: #{information_bottleneck.3} parent=27 // pred_region
        _
      $region36: #{information_bottleneck.3} parent=27 // pred_fallthru
        _
    $region28: #{information_bottleneck.3} parent=5 // pred_fallthru
      _
    %p333 = scmp.le.s32.totalorder 2, %s10
    // Predicated region
    $region37: #{information_bottleneck.3} parent=5 // pred_check
      %p334 = pneg %p333
    $region38: #{information_bottleneck.3} parent=5 // pred_check_branch
      %336 = sbr.rel (%p334) target = $region40
    $region39: #{information_bottleneck.3} parent=5 // pred_region
      %s337 = ssub.s32 %s10, 2
      // Predicated region
      $region41: #{information_bottleneck.3} parent=39 // pred_check
        %p338 = pneg %p102
      $region42: #{information_bottleneck.3} parent=39 // pred_check_branch
        %340 = sbr.rel (%p338) target = $region44
      $region43: #{information_bottleneck.3} parent=39 // pred_region
        %s341 = smul.u32 2, %s22
        %p342 = scmp.lt.s32.totalorder %s21, 1
        %s343 = scalar_select %p342, %s21, 1
        %p344 = scmp.lt.s32.totalorder %s341, 1
        %s345 = scalar_select %p344, %s341, 1
        %s346 = smul.addr %s343, 2
        %s347 = sadd.s32 %s345, %s346
        %s348 = smul.addr %s347, 2
        %s349 = scalar_lea.vmem %s2, %s348
      $region44: #{information_bottleneck.3} parent=39 // pred_fallthru
        _
      // Predicated region
      $region45: #{information_bottleneck.3} parent=39 // pred_check
        %p350 = pneg %p130
      $region46: #{information_bottleneck.3} parent=39 // pred_check_branch
        %352 = sbr.rel (%p350) target = $region48
      $region47: #{information_bottleneck.3} parent=39 // pred_region
        %p353 = scmp.lt.s32.totalorder %s21, 1
        %s354 = scalar_select %p353, %s21, 1
        %p355 = scmp.lt.s32.totalorder %s22, 0
        %s356 = scalar_select %p355, %s22, 0
        %s357 = sadd.s32 %s356, %s354
        %s358 = smul.addr %s357, 2
        %s359 = scalar_lea.vmem %s3, %s358
      $region48: #{information_bottleneck.3} parent=39 // pred_fallthru
        _
    $region40: #{information_bottleneck.3} parent=5 // pred_fallthru
      _
  $region6: #{information_bottleneck.3} parent=0 // loop_footer
    %s14 = sadd.s32 1, %s10
  $region7: #{information_bottleneck.3} parent=0 // loop_footer_branch
    %9 = sbr.rel target = $region3
  $region8: #{information_bottleneck.3} parent=0 // loop_exit
    _

// kernel: information_bottleneck.4
$region0: #{information_bottleneck.4}
  #allocation0 [shape = 'u32[]', space=smem, size = 0x4, offset = 0x4, fixed_abs, tag = 'smem constant byte address 0x4 - core index']
  #allocation1 [shape = 'u32[72,128]{1,0:T(1,128)}', space=vmem, size = 0x9000, scoped, tag = 'internal scratch']
  %s0 = inlined_call_operand.vmem [shape: f32[2,2,256], index: 0, kind: input, shape index: {}]
  %s1 = inlined_call_operand.vmem [shape: f32[2,1], index: 1, kind: input, shape index: {}]
  %s2 = inlined_call_operand.vmem [shape: f32[2,1], index: 2, kind: input, shape index: {}]
  %s3 = inlined_call_operand.vmem [shape: f32[4,2], index: 3, kind: input, shape index: {}]
  %s4 = inlined_call_operand.vmem [shape: f32[2,1,4,2], index: 4, kind: output, shape index: {}]
  %s5 = sld [smem:[#allocation0]]
  $region49: #{information_bottleneck.4} parent=0
    _
  %s7 = ssub.s32 1, %s5
  %s8 = scalar_select 0, %s7, %s5
  loop: start=0, step=1, limit=4
  $region2: #{information_bottleneck.4} parent=0 // loop_pre_header
    _
  $region3: #{information_bottleneck.4} parent=0 // loop_header
    %s10 = sphi 0, %s14
    %p11 = scmp.ge.s32.totalorder %s10, 4
    %s17 = sphi 0, %s29
    %s18 = sphi 0, %s25
    %s19 = sphi 0, %s17
    %s20 = sphi 0, %s18
    %s21 = sphi 0, %s19
    %s22 = sphi 0, %s20
    %s34 = sphi 0, %s36
    %s37 = sphi 0, %s34
    %s38 = sphi 0, %s37
    %s54 = sphi 0, %s38
    %s58 = sphi 0, %s58
    %s60 = sphi 0, %s58
    %s61 = sphi 0, %s60
    %s75 = sphi 0, %s61
    %s79 = sphi 0, %s79
    %s81 = sphi 0, %s79
    %s82 = sphi 0, %s81
    %s96 = sphi 0, %s82
    %s100 = sphi 0, %s100
    %s102 = sphi 0, %s100
    %s103 = sphi 0, %s102
    %s117 = sphi 0, %s103
    %s125 = sphi 0, %s127
    %s128 = sphi 0, %s125
    %s129 = sphi 0, %s128
    %s145 = sphi 0, %s129
  $region4: #{information_bottleneck.4} parent=0 // loop_header_branch
    %13 = sbr.rel (%p11) target = $region8
  $region5: #{information_bottleneck.4} parent=0 // loop_body
    %s15 = ssub.s32 %s10, 1
    %s16 = ssub.s32 %s10, 2
    %s23 = sadd.s32 1, %s18
    %p24 = scmp.ge.s32.totalorder %s23, 1
    %s25 = scalar_select %p24, 0, %s23
    %s26 = sadd.s32 1, %s17
    %s27 = scalar_select %p24, %s26, %s17
    %p28 = scmp.ge.s32.totalorder %s27, 2
    %s29 = scalar_select %p28, 0, %s27
    %s30 = ssub.s32 %s17, %s29
    %s31 = ssub.s32 %s18, %s25
    %s32 = sor.u32 %s30, %s31
    %p33 = scmp.eq.s32.totalorder %s32, 0
    %s35 = sadd.s32 %s34, 1
    %s36 = scalar_select %p33, %s34, %s35
    %p39 = pneg %p33
    %p40 = scmp.eq.s32.totalorder %s10, 1
    %p41 = por %p39, %p40
    %p42 = scmp.ne.s32.totalorder %s34, %s37
    %p43 = scmp.eq.s32.totalorder %s10, 0
    %p44 = por %p42, %p43
    %p45 = scmp.ne.s32.totalorder %s34, %s37
    %p46 = scmp.eq.s32.totalorder %s15, 1
    %p47 = por %p45, %p46
    %p48 = scmp.ne.s32.totalorder %s37, %s38
    %p49 = scmp.eq.s32.totalorder %s15, 0
    %p50 = por %p48, %p49
    %p51 = scmp.ne.s32.totalorder %s37, %s38
    %p52 = scmp.eq.s32.totalorder %s16, 1
    %p53 = por %p51, %p52
    %p55 = scmp.ne.s32.totalorder %s38, %s54
    %p56 = scmp.eq.s32.totalorder %s16, 0
    %p57 = por %p55, %p56
    %s59 = sadd.s32 %s58, 1
    %p62 = scmp.eq.s32.totalorder %s10, 1
    %p63 = scmp.ne.s32.totalorder %s58, %s60
    %p64 = scmp.eq.s32.totalorder %s10, 0
    %p65 = por %p63, %p64
    %p66 = scmp.ne.s32.totalorder %s58, %s60
    %p67 = scmp.eq.s32.totalorder %s15, 1
    %p68 = por %p66, %p67
    %p69 = scmp.ne.s32.totalorder %s60, %s61
    %p70 = scmp.eq.s32.totalorder %s15, 0
    %p71 = por %p69, %p70
    %p72 = scmp.ne.s32.totalorder %s60, %s61
    %p73 = scmp.eq.s32.totalorder %s16, 1
    %p74 = por %p72, %p73
    %p76 = scmp.ne.s32.totalorder %s61, %s75
    %p77 = scmp.eq.s32.totalorder %s16, 0
    %p78 = por %p76, %p77
    %s80 = sadd.s32 %s79, 1
    %p83 = scmp.eq.s32.totalorder %s10, 1
    %p84 = scmp.ne.s32.totalorder %s79, %s81
    %p85 = scmp.eq.s32.totalorder %s10, 0
    %p86 = por %p84, %p85
    %p87 = scmp.ne.s32.totalorder %s79, %s81
    %p88 = scmp.eq.s32.totalorder %s15, 1
    %p89 = por %p87, %p88
    %p90 = scmp.ne.s32.totalorder %s81, %s82
    %p91 = scmp.eq.s32.totalorder %s15, 0
    %p92 = por %p90, %p91
    %p93 = scmp.ne.s32.totalorder %s81, %s82
    %p94 = scmp.eq.s32.totalorder %s16, 1
    %p95 = por %p93, %p94
    %p97 = scmp.ne.s32.totalorder %s82, %s96
    %p98 = scmp.eq.s32.totalorder %s16, 0
    %p99 = por %p97, %p98
    %s101 = sadd.s32 %s100, 1
    %p104 = scmp.eq.s32.totalorder %s10, 1
    %p105 = scmp.ne.s32.totalorder %s100, %s102
    %p106 = scmp.eq.s32.totalorder %s10, 0
    %p107 = por %p105, %p106
    %p108 = scmp.ne.s32.totalorder %s100, %s102
    %p109 = scmp.eq.s32.totalorder %s15, 1
    %p110 = por %p108, %p109
    %p111 = scmp.ne.s32.totalorder %s102, %s103
    %p112 = scmp.eq.s32.totalorder %s15, 0
    %p113 = por %p111, %p112
    %p114 = scmp.ne.s32.totalorder %s102, %s103
    %p115 = scmp.eq.s32.totalorder %s16, 1
    %p116 = por %p114, %p115
    %p118 = scmp.ne.s32.totalorder %s103, %s117
    %p119 = scmp.eq.s32.totalorder %s16, 0
    %p120 = por %p118, %p119
    %s121 = ssub.s32 %s17, %s29
    %s122 = ssub.s32 %s18, %s25
    %s123 = sor.u32 %s121, %s122
    %p124 = scmp.eq.s32.totalorder %s123, 0
    %s126 = sadd.s32 %s125, 1
    %s127 = scalar_select %p124, %s125, %s126
    %p130 = pneg %p124
    %p131 = scmp.eq.s32.totalorder %s10, 1
    %p132 = por %p130, %p131
    %p133 = scmp.ne.s32.totalorder %s125, %s128
    %p134 = scmp.eq.s32.totalorder %s10, 0
    %p135 = por %p133, %p134
    %p136 = scmp.ne.s32.totalorder %s125, %s128
    %p137 = scmp.eq.s32.totalorder %s15, 1
    %p138 = por %p136, %p137
    %p139 = scmp.ne.s32.totalorder %s128, %s129
    %p140 = scmp.eq.s32.totalorder %s15, 0
    %p141 = por %p139, %p140
    %p142 = scmp.ne.s32.totalorder %s128, %s129
    %p143 = scmp.eq.s32.totalorder %s16, 1
    %p144 = por %p142, %p143
    %p146 = scmp.ne.s32.totalorder %s129, %s145
    %p147 = scmp.eq.s32.totalorder %s16, 0
    %p148 = por %p146, %p147
    %p149 = scmp.le.s32.totalorder 1, %s10
    %p150 = scmp.lt.s32.totalorder %s10, 3
    %p151 = pnand %p149, %p150
    %p152 = pneg %p151
    // Predicated region
    $region9: #{information_bottleneck.4} parent=5 // pred_check
      _
    $region10: #{information_bottleneck.4} parent=5 // pred_check_branch
      %154 = sbr.rel (%p151) target = $region12
    $region11: #{information_bottleneck.4} parent=5 // pred_region
      %s155 = ssub.s32 %s10, 1
      // Predicated region
      $region13: #{information_bottleneck.4} parent=11 // pred_check
        %p156 = pneg %p71
      $region14: #{information_bottleneck.4} parent=11 // pred_check_branch
        %158 = sbr.rel (%p156) target = $region16
      $region15: #{information_bottleneck.4} parent=11 // pred_region
        _
      $region16: #{information_bottleneck.4} parent=11 // pred_fallthru
        _
      // Predicated region
      $region17: #{information_bottleneck.4} parent=11 // pred_check
        %p159 = pneg %p92
      $region18: #{information_bottleneck.4} parent=11 // pred_check_branch
        %161 = sbr.rel (%p159) target = $region20
      $region19: #{information_bottleneck.4} parent=11 // pred_region
        _
      $region20: #{information_bottleneck.4} parent=11 // pred_fallthru
        _
      // Predicated region
      $region21: #{information_bottleneck.4} parent=11 // pred_check
        %p162 = pneg %p113
      $region22: #{information_bottleneck.4} parent=11 // pred_check_branch
        %164 = sbr.rel (%p162) target = $region24
      $region23: #{information_bottleneck.4} parent=11 // pred_region
        _
      $region24: #{information_bottleneck.4} parent=11 // pred_fallthru
        _
    $region12: #{information_bottleneck.4} parent=5 // pred_fallthru
      _
    %p165 = scmp.lt.s32.totalorder %s10, 2
    // Predicated region
    $region25: #{information_bottleneck.4} parent=5 // pred_check
      %p166 = pneg %p165
    $region26: #{information_bottleneck.4} parent=5 // pred_check_branch
      %168 = sbr.rel (%p166) target = $region28
    $region27: #{information_bottleneck.4} parent=5 // pred_region
      // Predicated region
      $region29: #{information_bottleneck.4} parent=27 // pred_check
        %p169 = pneg %p44
      $region30: #{information_bottleneck.4} parent=27 // pred_check_branch
        %171 = sbr.rel (%p169) target = $region32
      $region31: #{information_bottleneck.4} parent=27 // pred_region
        %s172 = smul.u32 2, %s18
        %p173 = scmp.lt.s32.totalorder %s17, 1
        %s174 = scalar_select %p173, %s17, 1
        %p175 = scmp.lt.s32.totalorder %s172, 1
        %s176 = scalar_select %p175, %s172, 1
        %s177 = smul.addr %s174, 2
        %s178 = sadd.s32 %s176, %s177
        %s179 = smul.addr %s178, 2
        %s180 = scalar_lea.vmem %s0, %s179
        %s181 = smul.u32 2, %s18
      $region32: #{information_bottleneck.4} parent=27 // pred_fallthru
        _
    $region28: #{information_bottleneck.4} parent=5 // pred_fallthru
      _
    %p182 = scmp.le.s32.totalorder 1, %s10
    %p183 = scmp.lt.s32.totalorder %s10, 3
    %p184 = pnand %p182, %p183
    %p185 = pneg %p184
    // Predicated region
    $region33: #{information_bottleneck.4} parent=5 // pred_check
      _
    $region34: #{information_bottleneck.4} parent=5 // pred_check_branch
      %187 = sbr.rel (%p184) target = $region36
    $region35: #{information_bottleneck.4} parent=5 // pred_region
      %s188 = ssub.s32 %s10, 1
      %s189 = smul.u32 2, %s20
      %p190 = scmp.lt.s32.totalorder %s19, 1
      %s191 = scalar_select %p190, %s19, 1
      %p192 = scmp.lt.s32.totalorder %s189, 1
      %s193 = scalar_select %p192, %s189, 1
      %s194 = smul.addr %s191, 2
      %s195 = sadd.s32 %s193, %s194
      %s196 = smul.addr %s195, 2
      %s197 = scalar_lea.vmem %s0, %s196
      %p198 = pneg %p50
      %p199 = pneg %p47
      %p200 = pneg %p71
      %p201 = pneg %p68
      %p202 = pneg %p92
      %p203 = pneg %p89
      %p204 = pneg %p113
      %p205 = pneg %p110
      %p206 = pneg %p141
      %p207 = pneg %p138
      %p208 = scmp.lt.s32.totalorder %s19, 1
      %s209 = scalar_select %p208, %s19, 1
      %p210 = scmp.lt.s32.totalorder %s20, 0
      %s211 = scalar_select %p210, %s20, 0
      %s212 = sadd.s32 %s211, %s209
      %s213 = smul.addr %s212, 4
      %s214 = scalar_lea.vmem %s4, %s213
      %s215 = smul.u32 2, %s20
      %p216 = scmp.lt.s32.totalorder %s19, 1
      %s217 = scalar_select %p216, %s19, 1
      %p218 = scmp.lt.s32.totalorder %s215, 1
      %s219 = scalar_select %p218, %s215, 1
      %s220 = smul.addr %s217, 2
      %s221 = sadd.s32 %s219, %s220
      %s222 = smul.addr %s221, 2
      %s223 = scalar_lea.vmem %s0, %s222
      %s224 = smul.u32 2, %s20
      %p225 = scmp.lt.s32.totalorder %s19, 1
      %s226 = scalar_select %p225, %s19, 1
      %p227 = scmp.lt.s32.totalorder %s20, 0
      %s228 = scalar_select %p227, %s20, 0
      %s229 = sadd.s32 %s228, %s226
      %s230 = smul.addr %s229, 4
      %s231 = scalar_lea.vmem %s4, %s230
      %v232 = vld [vmem:[%s223] sm:$0xf]
      %v233 = vld [vmem:[%s1] sm:$0x3]
      %235 = vset.pattern.permute.xlu0 0
      %236 = vperm.xlu0 %235, %v233
      %v237 = vpop.permute.xlu0 %236
      %v239 = vunpack.c.l.s4 269488144
      %v240 = vunpack.c.0.s8 %v239
      %v241 = vperm.slane %v237, %v240
      %v243 = vmul.f32 %v232, %v241
      %v244 = vld [vmem:[%s2] sm:$0x3]
      %246 = vset.pattern.permute.xlu0 0
      %247 = vperm.xlu0 %246, %v244
      %v248 = vpop.permute.xlu0 %247
      %v250 = vunpack.c.l.s4 269488144
      %v251 = vunpack.c.0.s8 %v250
      %v252 = vperm.slane %v248, %v251
      %v254 = vadd.f32 %v243, %v252
      %v255 = vmax.f32 %v254, 0.0
      %v256 = vld [vmem:[%s3] sm:$0xf]
      %258 = vset.pattern.permute.xlu0 0
      %259 = vperm.xlu0 %258, %v256
      %v260 = vpop.permute.xlu0 %259
      %v263 = vperm.slane %v255, 0
      %v264 = vperm.slane %v255, 2
      %v267 = vperm.slane %v263, 0
      %v268 = vperm.slane %v264, 0
      %v269 = vmul.f32 %v260, %v267
      %v270 = vmul.f32 %v260, %v268
      %271 = vset.pattern.permute.xlu0 1
      %272 = vperm.xlu0 %271, %v256
      %v273 = vpop.permute.xlu0 %272
      %v275 = vperm.slane %v255, 1
      %v276 = vperm.slane %v255, 3
      %v279 = vperm.slane %v275, 1
      %v280 = vperm.slane %v276, 1
      %v281 = vmul.f32 %v273, %v279
      %v282 = vmul.f32 %v273, %v280
      %v283 = vadd.f32 %v269, %v281
      %v284 = vadd.f32 %v270, %v282
      %vm285 = vcmask 1043456
      %v286 = vsel %vm285, %v283, 0.0
      %v287 = vsel %vm285, %v284, 0.0
      %v288 = vadd.f32 %v286, %v287
      %289 = vadd.xlane.f32.xlu0 %v288
      %v290 = vpop.xlane.xlu0 %289
      %v291 = vmul.f32 %v283, %v283
      %v292 = vmul.f32 %v284, %v284
      %v293 = vsel %vm285, %v291, 0.0
      %v294 = vsel %vm285, %v292, 0.0
      %v295 = vadd.f32 %v293, %v294
      %296 = vadd.xlane.f32.xlu0 %v295
      %v297 = vpop.xlane.xlu0 %296
      %vm298 = vcmask 7168
      %v299 = vsel %vm298, %v290, %v297
      %vm300 = vcmask 11264
      %301 = vst.msk [vmem:[%s231] sm:$0xf] %vm300, %v299
      %p302 = scmp.lt.s32.totalorder %s19, 1
      %s303 = scalar_select %p302, %s19, 1
      %p304 = scmp.lt.s32.totalorder %s20, 0
      %s305 = scalar_select %p304, %s20, 0
      %s306 = sadd.s32 %s305, %s303
      %s307 = smul.addr %s306, 4
      %s308 = scalar_lea.vmem %s4, %s307
      // Predicated region
      $region37: #{information_bottleneck.4} parent=35 // pred_check
        %p309 = pneg %p138
      $region38: #{information_bottleneck.4} parent=35 // pred_check_branch
        %311 = sbr.rel (%p309) target = $region40
      $region39: #{information_bottleneck.4} parent=35 // pred_region
        _
      $region40: #{information_bottleneck.4} parent=35 // pred_fallthru
        _
    $region36: #{information_bottleneck.4} parent=5 // pred_fallthru
      _
    %p312 = scmp.le.s32.totalorder 2, %s10
    // Predicated region
    $region41: #{information_bottleneck.4} parent=5 // pred_check
      %p313 = pneg %p312
    $region42: #{information_bottleneck.4} parent=5 // pred_check_branch
      %315 = sbr.rel (%p313) target = $region44
    $region43: #{information_bottleneck.4} parent=5 // pred_region
      %s316 = ssub.s32 %s10, 2
      // Predicated region
      $region45: #{information_bottleneck.4} parent=43 // pred_check
        %p317 = pneg %p144
      $region46: #{information_bottleneck.4} parent=43 // pred_check_branch
        %319 = sbr.rel (%p317) target = $region48
      $region47: #{information_bottleneck.4} parent=43 // pred_region
        %p320 = scmp.lt.s32.totalorder %s21, 1
        %s321 = scalar_select %p320, %s21, 1
        %p322 = scmp.lt.s32.totalorder %s22, 0
        %s323 = scalar_select %p322, %s22, 0
        %s324 = sadd.s32 %s323, %s321
        %s325 = smul.addr %s324, 4
        %s326 = scalar_lea.vmem %s4, %s325
      $region48: #{information_bottleneck.4} parent=43 // pred_fallthru
        _
    $region44: #{information_bottleneck.4} parent=5 // pred_fallthru
      _
  $region6: #{information_bottleneck.4} parent=0 // loop_footer
    %s14 = sadd.s32 1, %s10
  $region7: #{information_bottleneck.4} parent=0 // loop_footer_branch
    %9 = sbr.rel target = $region3
  $region8: #{information_bottleneck.4} parent=0 // loop_exit
    _

// kernel: information_bottleneck.5
$region0: #{information_bottleneck.5}
  #allocation0 [shape = 'u32[]', space=smem, size = 0x4, offset = 0x4, fixed_abs, tag = 'smem constant byte address 0x4 - core index']
  #allocation1 [shape = 'u32[72,128]{1,0:T(1,128)}', space=vmem, size = 0x9000, scoped, tag = 'internal scratch']
  #allocation2 [shape = 'f32[1]{0:T(128)S(6)}', space=smem, size = 0x200, scoped, tag = 'scoped memory for information_bottleneck.5']
  %s0 = inlined_call_operand.vmem [shape: f32[2,4,256], index: 0, kind: input, shape index: {}]
  %s1 = inlined_call_operand.vmem [shape: f32[2,2,256], index: 1, kind: input, shape index: {}]
  %s2 = inlined_call_operand.vmem [shape: f32[2,1], index: 2, kind: input, shape index: {}]
  %s3 = inlined_call_operand.vmem [shape: f32[2,1], index: 3, kind: input, shape index: {}]
  %s4 = inlined_call_operand.vmem [shape: f32[4,2], index: 4, kind: input, shape index: {}]
  %s5 = inlined_call_operand.vmem [shape: f32[4,1], index: 5, kind: input, shape index: {}]
  %s6 = inlined_call_operand.vmem [shape: f32[4,1], index: 6, kind: input, shape index: {}]
  %s7 = inlined_call_operand.<no memory space> [shape: f32[1], index: 7, kind: input, shape index: {}]
  %s8 = inlined_call_operand.vmem [shape: f32[2,4,256], index: 8, kind: output, shape index: {}]
  %s9 = sld [smem:[#allocation0]]
  $region65: #{information_bottleneck.5} parent=0
    _
  %s11 = ssub.s32 1, %s9
  %s12 = scalar_select 0, %s11, %s9
  %13 = sst [smem:[#allocation2]] %s7
  loop: start=0, step=1, limit=4
  $region2: #{information_bottleneck.5} parent=0 // loop_pre_header
    _
  $region3: #{information_bottleneck.5} parent=0 // loop_header
    %s15 = sphi 0, %s19
    %p16 = scmp.ge.s32.totalorder %s15, 4
    %s22 = sphi 0, %s34
    %s23 = sphi 0, %s30
    %s24 = sphi 0, %s22
    %s25 = sphi 0, %s23
    %s26 = sphi 0, %s24
    %s27 = sphi 0, %s25
    %s39 = sphi 0, %s41
    %s42 = sphi 0, %s39
    %s43 = sphi 0, %s42
    %s59 = sphi 0, %s43
    %s67 = sphi 0, %s69
    %s70 = sphi 0, %s67
    %s71 = sphi 0, %s70
    %s87 = sphi 0, %s71
    %s91 = sphi 0, %s91
    %s93 = sphi 0, %s91
    %s94 = sphi 0, %s93
    %s108 = sphi 0, %s94
    %s112 = sphi 0, %s112
    %s114 = sphi 0, %s112
    %s115 = sphi 0, %s114
    %s129 = sphi 0, %s115
    %s133 = sphi 0, %s133
    %s135 = sphi 0, %s133
    %s136 = sphi 0, %s135
    %s150 = sphi 0, %s136
    %s154 = sphi 0, %s154
    %s156 = sphi 0, %s154
    %s157 = sphi 0, %s156
    %s171 = sphi 0, %s157
    %s175 = sphi 0, %s175
    %s177 = sphi 0, %s175
    %s178 = sphi 0, %s177
    %s192 = sphi 0, %s178
    %s196 = sphi 0, %s196
    %s198 = sphi 0, %s196
    %s199 = sphi 0, %s198
    %s213 = sphi 0, %s199
    %s221 = sphi 0, %s223
    %s224 = sphi 0, %s221
    %s225 = sphi 0, %s224
    %s241 = sphi 0, %s225
  $region4: #{information_bottleneck.5} parent=0 // loop_header_branch
    %18 = sbr.rel (%p16) target = $region8
  $region5: #{information_bottleneck.5} parent=0 // loop_body
    %s20 = ssub.s32 %s15, 1
    %s21 = ssub.s32 %s15, 2
    %s28 = sadd.s32 1, %s23
    %p29 = scmp.ge.s32.totalorder %s28, 1
    %s30 = scalar_select %p29, 0, %s28
    %s31 = sadd.s32 1, %s22
    %s32 = scalar_select %p29, %s31, %s22
    %p33 = scmp.ge.s32.totalorder %s32, 2
    %s34 = scalar_select %p33, 0, %s32
    %s35 = ssub.s32 %s22, %s34
    %s36 = ssub.s32 %s23, %s30
    %s37 = sor.u32 %s35, %s36
    %p38 = scmp.eq.s32.totalorder %s37, 0
    %s40 = sadd.s32 %s39, 1
    %s41 = scalar_select %p38, %s39, %s40
    %p44 = pneg %p38
    %p45 = scmp.eq.s32.totalorder %s15, 1
    %p46 = por %p44, %p45
    %p47 = scmp.ne.s32.totalorder %s39, %s42
    %p48 = scmp.eq.s32.totalorder %s15, 0
    %p49 = por %p47, %p48
    %p50 = scmp.ne.s32.totalorder %s39, %s42
    %p51 = scmp.eq.s32.totalorder %s20, 1
    %p52 = por %p50, %p51
    %p53 = scmp.ne.s32.totalorder %s42, %s43
    %p54 = scmp.eq.s32.totalorder %s20, 0
    %p55 = por %p53, %p54
    %p56 = scmp.ne.s32.totalorder %s42, %s43
    %p57 = scmp.eq.s32.totalorder %s21, 1
    %p58 = por %p56, %p57
    %p60 = scmp.ne.s32.totalorder %s43, %s59
    %p61 = scmp.eq.s32.totalorder %s21, 0
    %p62 = por %p60, %p61
    %s63 = ssub.s32 %s22, %s34
    %s64 = ssub.s32 %s23, %s30
    %s65 = sor.u32 %s63, %s64
    %p66 = scmp.eq.s32.totalorder %s65, 0
    %s68 = sadd.s32 %s67, 1
    %s69 = scalar_select %p66, %s67, %s68
    %p72 = pneg %p66
    %p73 = scmp.eq.s32.totalorder %s15, 1
    %p74 = por %p72, %p73
    %p75 = scmp.ne.s32.totalorder %s67, %s70
    %p76 = scmp.eq.s32.totalorder %s15, 0
    %p77 = por %p75, %p76
    %p78 = scmp.ne.s32.totalorder %s67, %s70
    %p79 = scmp.eq.s32.totalorder %s20, 1
    %p80 = por %p78, %p79
    %p81 = scmp.ne.s32.totalorder %s70, %s71
    %p82 = scmp.eq.s32.totalorder %s20, 0
    %p83 = por %p81, %p82
    %p84 = scmp.ne.s32.totalorder %s70, %s71
    %p85 = scmp.eq.s32.totalorder %s21, 1
    %p86 = por %p84, %p85
    %p88 = scmp.ne.s32.totalorder %s71, %s87
    %p89 = scmp.eq.s32.totalorder %s21, 0
    %p90 = por %p88, %p89
    %s92 = sadd.s32 %s91, 1
    %p95 = scmp.eq.s32.totalorder %s15, 1
    %p96 = scmp.ne.s32.totalorder %s91, %s93
    %p97 = scmp.eq.s32.totalorder %s15, 0
    %p98 = por %p96, %p97
    %p99 = scmp.ne.s32.totalorder %s91, %s93
    %p100 = scmp.eq.s32.totalorder %s20, 1
    %p101 = por %p99, %p100
    %p102 = scmp.ne.s32.totalorder %s93, %s94
    %p103 = scmp.eq.s32.totalorder %s20, 0
    %p104 = por %p102, %p103
    %p105 = scmp.ne.s32.totalorder %s93, %s94
    %p106 = scmp.eq.s32.totalorder %s21, 1
    %p107 = por %p105, %p106
    %p109 = scmp.ne.s32.totalorder %s94, %s108
    %p110 = scmp.eq.s32.totalorder %s21, 0
    %p111 = por %p109, %p110
    %s113 = sadd.s32 %s112, 1
    %p116 = scmp.eq.s32.totalorder %s15, 1
    %p117 = scmp.ne.s32.totalorder %s112, %s114
    %p118 = scmp.eq.s32.totalorder %s15, 0
    %p119 = por %p117, %p118
    %p120 = scmp.ne.s32.totalorder %s112, %s114
    %p121 = scmp.eq.s32.totalorder %s20, 1
    %p122 = por %p120, %p121
    %p123 = scmp.ne.s32.totalorder %s114, %s115
    %p124 = scmp.eq.s32.totalorder %s20, 0
    %p125 = por %p123, %p124
    %p126 = scmp.ne.s32.totalorder %s114, %s115
    %p127 = scmp.eq.s32.totalorder %s21, 1
    %p128 = por %p126, %p127
    %p130 = scmp.ne.s32.totalorder %s115, %s129
    %p131 = scmp.eq.s32.totalorder %s21, 0
    %p132 = por %p130, %p131
    %s134 = sadd.s32 %s133, 1
    %p137 = scmp.eq.s32.totalorder %s15, 1
    %p138 = scmp.ne.s32.totalorder %s133, %s135
    %p139 = scmp.eq.s32.totalorder %s15, 0
    %p140 = por %p138, %p139
    %p141 = scmp.ne.s32.totalorder %s133, %s135
    %p142 = scmp.eq.s32.totalorder %s20, 1
    %p143 = por %p141, %p142
    %p144 = scmp.ne.s32.totalorder %s135, %s136
    %p145 = scmp.eq.s32.totalorder %s20, 0
    %p146 = por %p144, %p145
    %p147 = scmp.ne.s32.totalorder %s135, %s136
    %p148 = scmp.eq.s32.totalorder %s21, 1
    %p149 = por %p147, %p148
    %p151 = scmp.ne.s32.totalorder %s136, %s150
    %p152 = scmp.eq.s32.totalorder %s21, 0
    %p153 = por %p151, %p152
    %s155 = sadd.s32 %s154, 1
    %p158 = scmp.eq.s32.totalorder %s15, 1
    %p159 = scmp.ne.s32.totalorder %s154, %s156
    %p160 = scmp.eq.s32.totalorder %s15, 0
    %p161 = por %p159, %p160
    %p162 = scmp.ne.s32.totalorder %s154, %s156
    %p163 = scmp.eq.s32.totalorder %s20, 1
    %p164 = por %p162, %p163
    %p165 = scmp.ne.s32.totalorder %s156, %s157
    %p166 = scmp.eq.s32.totalorder %s20, 0
    %p167 = por %p165, %p166
    %p168 = scmp.ne.s32.totalorder %s156, %s157
    %p169 = scmp.eq.s32.totalorder %s21, 1
    %p170 = por %p168, %p169
    %p172 = scmp.ne.s32.totalorder %s157, %s171
    %p173 = scmp.eq.s32.totalorder %s21, 0
    %p174 = por %p172, %p173
    %s176 = sadd.s32 %s175, 1
    %p179 = scmp.eq.s32.totalorder %s15, 1
    %p180 = scmp.ne.s32.totalorder %s175, %s177
    %p181 = scmp.eq.s32.totalorder %s15, 0
    %p182 = por %p180, %p181
    %p183 = scmp.ne.s32.totalorder %s175, %s177
    %p184 = scmp.eq.s32.totalorder %s20, 1
    %p185 = por %p183, %p184
    %p186 = scmp.ne.s32.totalorder %s177, %s178
    %p187 = scmp.eq.s32.totalorder %s20, 0
    %p188 = por %p186, %p187
    %p189 = scmp.ne.s32.totalorder %s177, %s178
    %p190 = scmp.eq.s32.totalorder %s21, 1
    %p191 = por %p189, %p190
    %p193 = scmp.ne.s32.totalorder %s178, %s192
    %p194 = scmp.eq.s32.totalorder %s21, 0
    %p195 = por %p193, %p194
    %s197 = sadd.s32 %s196, 1
    %p200 = scmp.eq.s32.totalorder %s15, 1
    %p201 = scmp.ne.s32.totalorder %s196, %s198
    %p202 = scmp.eq.s32.totalorder %s15, 0
    %p203 = por %p201, %p202
    %p204 = scmp.ne.s32.totalorder %s196, %s198
    %p205 = scmp.eq.s32.totalorder %s20, 1
    %p206 = por %p204, %p205
    %p207 = scmp.ne.s32.totalorder %s198, %s199
    %p208 = scmp.eq.s32.totalorder %s20, 0
    %p209 = por %p207, %p208
    %p210 = scmp.ne.s32.totalorder %s198, %s199
    %p211 = scmp.eq.s32.totalorder %s21, 1
    %p212 = por %p210, %p211
    %p214 = scmp.ne.s32.totalorder %s199, %s213
    %p215 = scmp.eq.s32.totalorder %s21, 0
    %p216 = por %p214, %p215
    %s217 = ssub.s32 %s22, %s34
    %s218 = ssub.s32 %s23, %s30
    %s219 = sor.u32 %s217, %s218
    %p220 = scmp.eq.s32.totalorder %s219, 0
    %s222 = sadd.s32 %s221, 1
    %s223 = scalar_select %p220, %s221, %s222
    %p226 = pneg %p220
    %p227 = scmp.eq.s32.totalorder %s15, 1
    %p228 = por %p226, %p227
    %p229 = scmp.ne.s32.totalorder %s221, %s224
    %p230 = scmp.eq.s32.totalorder %s15, 0
    %p231 = por %p229, %p230
    %p232 = scmp.ne.s32.totalorder %s221, %s224
    %p233 = scmp.eq.s32.totalorder %s20, 1
    %p234 = por %p232, %p233
    %p235 = scmp.ne.s32.totalorder %s224, %s225
    %p236 = scmp.eq.s32.totalorder %s20, 0
    %p237 = por %p235, %p236
    %p238 = scmp.ne.s32.totalorder %s224, %s225
    %p239 = scmp.eq.s32.totalorder %s21, 1
    %p240 = por %p238, %p239
    %p242 = scmp.ne.s32.totalorder %s225, %s241
    %p243 = scmp.eq.s32.totalorder %s21, 0
    %p244 = por %p242, %p243
    %p245 = scmp.le.s32.totalorder 1, %s15
    %p246 = scmp.lt.s32.totalorder %s15, 3
    %p247 = pnand %p245, %p246
    %p248 = pneg %p247
    // Predicated region
    $region9: #{information_bottleneck.5} parent=5 // pred_check
      _
    $region10: #{information_bottleneck.5} parent=5 // pred_check_branch
      %250 = sbr.rel (%p247) target = $region12
    $region11: #{information_bottleneck.5} parent=5 // pred_region
      %s251 = ssub.s32 %s15, 1
      // Predicated region
      $region13: #{information_bottleneck.5} parent=11 // pred_check
        %p252 = pneg %p104
      $region14: #{information_bottleneck.5} parent=11 // pred_check_branch
        %254 = sbr.rel (%p252) target = $region16
      $region15: #{information_bottleneck.5} parent=11 // pred_region
        _
      $region16: #{information_bottleneck.5} parent=11 // pred_fallthru
        _
      // Predicated region
      $region17: #{information_bottleneck.5} parent=11 // pred_check
        %p255 = pneg %p125
      $region18: #{information_bottleneck.5} parent=11 // pred_check_branch
        %257 = sbr.rel (%p255) target = $region20
      $region19: #{information_bottleneck.5} parent=11 // pred_region
        _
      $region20: #{information_bottleneck.5} parent=11 // pred_fallthru
        _
      // Predicated region
      $region21: #{information_bottleneck.5} parent=11 // pred_check
        %p258 = pneg %p146
      $region22: #{information_bottleneck.5} parent=11 // pred_check_branch
        %260 = sbr.rel (%p258) target = $region24
      $region23: #{information_bottleneck.5} parent=11 // pred_region
        _
      $region24: #{information_bottleneck.5} parent=11 // pred_fallthru
        _
      // Predicated region
      $region25: #{information_bottleneck.5} parent=11 // pred_check
        %p261 = pneg %p167
      $region26: #{information_bottleneck.5} parent=11 // pred_check_branch
        %263 = sbr.rel (%p261) target = $region28
      $region27: #{information_bottleneck.5} parent=11 // pred_region
        _
      $region28: #{information_bottleneck.5} parent=11 // pred_fallthru
        _
      // Predicated region
      $region29: #{information_bottleneck.5} parent=11 // pred_check
        %p264 = pneg %p188
      $region30: #{information_bottleneck.5} parent=11 // pred_check_branch
        %266 = sbr.rel (%p264) target = $region32
      $region31: #{information_bottleneck.5} parent=11 // pred_region
        _
      $region32: #{information_bottleneck.5} parent=11 // pred_fallthru
        _
      // Predicated region
      $region33: #{information_bottleneck.5} parent=11 // pred_check
        %p267 = pneg %p209
      $region34: #{information_bottleneck.5} parent=11 // pred_check_branch
        %269 = sbr.rel (%p267) target = $region36
      $region35: #{information_bottleneck.5} parent=11 // pred_region
        _
      $region36: #{information_bottleneck.5} parent=11 // pred_fallthru
        _
    $region12: #{information_bottleneck.5} parent=5 // pred_fallthru
      _
    %p270 = scmp.lt.s32.totalorder %s15, 2
    // Predicated region
    $region37: #{information_bottleneck.5} parent=5 // pred_check
      %p271 = pneg %p270
    $region38: #{information_bottleneck.5} parent=5 // pred_check_branch
      %273 = sbr.rel (%p271) target = $region40
    $region39: #{information_bottleneck.5} parent=5 // pred_region
      // Predicated region
      $region41: #{information_bottleneck.5} parent=39 // pred_check
        %p274 = pneg %p49
      $region42: #{information_bottleneck.5} parent=39 // pred_check_branch
        %276 = sbr.rel (%p274) target = $region44
      $region43: #{information_bottleneck.5} parent=39 // pred_region
        %s277 = smul.u32 2, %s23
        %p278 = scmp.lt.s32.totalorder %s22, 1
        %s279 = scalar_select %p278, %s22, 1
        %p280 = scmp.lt.s32.totalorder %s277, 1
        %s281 = scalar_select %p280, %s277, 1
        %s282 = smul.addr %s279, 2
        %s283 = sadd.s32 %s281, %s282
        %s284 = smul.addr %s283, 4
        %s285 = scalar_lea.vmem %s0, %s284
        %s286 = smul.u32 2, %s23
      $region44: #{information_bottleneck.5} parent=39 // pred_fallthru
        _
      // Predicated region
      $region45: #{information_bottleneck.5} parent=39 // pred_check
        %p287 = pneg %p77
      $region46: #{information_bottleneck.5} parent=39 // pred_check_branch
        %289 = sbr.rel (%p287) target = $region48
      $region47: #{information_bottleneck.5} parent=39 // pred_region
        %s290 = smul.u32 2, %s23
        %p291 = scmp.lt.s32.totalorder %s22, 1
        %s292 = scalar_select %p291, %s22, 1
        %p293 = scmp.lt.s32.totalorder %s290, 1
        %s294 = scalar_select %p293, %s290, 1
        %s295 = smul.addr %s292, 2
        %s296 = sadd.s32 %s294, %s295
        %s297 = smul.addr %s296, 2
        %s298 = scalar_lea.vmem %s1, %s297
        %s299 = smul.u32 2, %s23
      $region48: #{information_bottleneck.5} parent=39 // pred_fallthru
        _
    $region40: #{information_bottleneck.5} parent=5 // pred_fallthru
      _
    %p300 = scmp.le.s32.totalorder 1, %s15
    %p301 = scmp.lt.s32.totalorder %s15, 3
    %p302 = pnand %p300, %p301
    %p303 = pneg %p302
    // Predicated region
    $region49: #{information_bottleneck.5} parent=5 // pred_check
      _
    $region50: #{information_bottleneck.5} parent=5 // pred_check_branch
      %305 = sbr.rel (%p302) target = $region52
    $region51: #{information_bottleneck.5} parent=5 // pred_region
      %s306 = ssub.s32 %s15, 1
      %s307 = smul.u32 2, %s25
      %p308 = scmp.lt.s32.totalorder %s24, 1
      %s309 = scalar_select %p308, %s24, 1
      %p310 = scmp.lt.s32.totalorder %s307, 1
      %s311 = scalar_select %p310, %s307, 1
      %s312 = smul.addr %s309, 2
      %s313 = sadd.s32 %s311, %s312
      %s314 = smul.addr %s313, 4
      %s315 = scalar_lea.vmem %s0, %s314
      %p316 = pneg %p55
      %p317 = pneg %p52
      %s318 = smul.u32 2, %s25
      %p319 = scmp.lt.s32.totalorder %s24, 1
      %s320 = scalar_select %p319, %s24, 1
      %p321 = scmp.lt.s32.totalorder %s318, 1
      %s322 = scalar_select %p321, %s318, 1
      %s323 = smul.addr %s320, 2
      %s324 = sadd.s32 %s322, %s323
      %s325 = smul.addr %s324, 2
      %s326 = scalar_lea.vmem %s1, %s325
      %p327 = pneg %p83
      %p328 = pneg %p80
      %p329 = pneg %p104
      %p330 = pneg %p101
      %p331 = pneg %p125
      %p332 = pneg %p122
      %p333 = pneg %p146
      %p334 = pneg %p143
      %p335 = pneg %p167
      %p336 = pneg %p164
      %p337 = pneg %p188
      %p338 = pneg %p185
      %p339 = pneg %p209
      %p340 = pneg %p206
      %p341 = pneg %p237
      %p342 = pneg %p234
      %s343 = smul.u32 2, %s25
      %p344 = scmp.lt.s32.totalorder %s24, 1
      %s345 = scalar_select %p344, %s24, 1
      %p346 = scmp.lt.s32.totalorder %s343, 1
      %s347 = scalar_select %p346, %s343, 1
      %s348 = smul.addr %s345, 2
      %s349 = sadd.s32 %s347, %s348
      %s350 = smul.addr %s349, 4
      %s351 = scalar_lea.vmem %s8, %s350
      %s352 = smul.u32 2, %s25
      %p353 = scmp.lt.s32.totalorder %s24, 1
      %s354 = scalar_select %p353, %s24, 1
      %p355 = scmp.lt.s32.totalorder %s352, 1
      %s356 = scalar_select %p355, %s352, 1
      %s357 = smul.addr %s354, 2
      %s358 = sadd.s32 %s356, %s357
      %s359 = smul.addr %s358, 4
      %s360 = scalar_lea.vmem %s0, %s359
      %s361 = smul.u32 2, %s25
      %s362 = smul.u32 2, %s25
      %p363 = scmp.lt.s32.totalorder %s24, 1
      %s364 = scalar_select %p363, %s24, 1
      %p365 = scmp.lt.s32.totalorder %s362, 1
      %s366 = scalar_select %p365, %s362, 1
      %s367 = smul.addr %s364, 2
      %s368 = sadd.s32 %s366, %s367
      %s369 = smul.addr %s368, 2
      %s370 = scalar_lea.vmem %s1, %s369
      %s371 = smul.u32 2, %s25
      %s372 = smul.u32 2, %s25
      %p373 = scmp.lt.s32.totalorder %s24, 1
      %s374 = scalar_select %p373, %s24, 1
      %p375 = scmp.lt.s32.totalorder %s372, 1
      %s376 = scalar_select %p375, %s372, 1
      %s377 = smul.addr %s374, 2
      %s378 = sadd.s32 %s376, %s377
      %s379 = smul.addr %s378, 4
      %s380 = scalar_lea.vmem %s8, %s379
      %s381 = smul.u32 2, %s25
      %s382 = sld [smem:[#allocation2]]
      %v383 = vld [vmem:[%s360] sm:$0xff]
      %v384 = vld [vmem:[%s370] sm:$0xf]
      %v385 = vld [vmem:[%s2] sm:$0x3]
      %387 = vset.pattern.permute.xlu0 0
      %388 = vperm.xlu0 %387, %v385
      %v389 = vpop.permute.xlu0 %388
      %v391 = vunpack.c.l.s4 269488144
      %v392 = vunpack.c.0.s8 %v391
      %v393 = vperm.slane %v389, %v392
      %v395 = vmul.f32 %v384, %v393
      %v396 = vld [vmem:[%s3] sm:$0x3]
      %398 = vset.pattern.permute.xlu0 0
      %399 = vperm.xlu0 %398, %v396
      %v400 = vpop.permute.xlu0 %399
      %v402 = vunpack.c.l.s4 269488144
      %v403 = vunpack.c.0.s8 %v402
      %v404 = vperm.slane %v400, %v403
      %v406 = vadd.f32 %v395, %v404
      %v407 = vmax.f32 %v406, 0.0
      %v408 = vld [vmem:[%s4] sm:$0xf]
      %410 = vset.pattern.permute.xlu0 0
      %411 = vperm.xlu0 %410, %v408
      %v412 = vpop.permute.xlu0 %411
      %v415 = vperm.slane %v407, 0
      %v416 = vperm.slane %v407, 2
      %v419 = vperm.slane %v415, 0
      %v420 = vperm.slane %v416, 0
      %v421 = vmul.f32 %v412, %v419
      %v422 = vmul.f32 %v412, %v420
      %423 = vset.pattern.permute.xlu0 1
      %424 = vperm.xlu0 %423, %v408
      %v425 = vpop.permute.xlu0 %424
      %v427 = vperm.slane %v407, 1
      %v428 = vperm.slane %v407, 3
      %v431 = vperm.slane %v427, 1
      %v432 = vperm.slane %v428, 1
      %v433 = vmul.f32 %v425, %v431
      %v434 = vmul.f32 %v425, %v432
      %v435 = vadd.f32 %v421, %v433
      %v436 = vadd.f32 %v422, %v434
      %v437 = vld [vmem:[%s5] sm:$0xf]
      %439 = vset.pattern.permute.xlu0 0
      %440 = vperm.xlu0 %439, %v437
      %v441 = vpop.permute.xlu0 %440
      %v443 = vmul.f32 %v435, %v441
      %v444 = vmul.f32 %v436, %v441
      %v445 = vld [vmem:[%s6] sm:$0xf]
      %447 = vset.pattern.permute.xlu0 0
      %448 = vperm.xlu0 %447, %v445
      %v449 = vpop.permute.xlu0 %448
      %v451 = vadd.f32 %v443, %v449
      %v452 = vadd.f32 %v444, %v449
      %v453 = vmax.f32 %v451, 0.0
      %v454 = vmax.f32 %v452, 0.0
      %v455 = vstv %s382
      %v456 = vmul.f32 %v455, %v383
      %s457 = ssub.f32 1.0, %s382
      %v458 = vstv %s457
      %v459 = vmul.f32 %v458, %v453
      %v460 = vmul.f32 %v458, %v454
      %v463 = vrot.slane %v460, 4
      %vm464 = vcmask 1043456
      %v465 = vsel %vm464, %v459, %v463
      %v467 = vadd.f32 %v456, %v465
      %468 = vst [vmem:[%s380] sm:$0xff] %v467
      %s469 = smul.u32 2, %s25
      %p470 = scmp.lt.s32.totalorder %s24, 1
      %s471 = scalar_select %p470, %s24, 1
      %p472 = scmp.lt.s32.totalorder %s469, 1
      %s473 = scalar_select %p472, %s469, 1
      %s474 = smul.addr %s471, 2
      %s475 = sadd.s32 %s473, %s474
      %s476 = smul.addr %s475, 4
      %s477 = scalar_lea.vmem %s8, %s476
      // Predicated region
      $region53: #{information_bottleneck.5} parent=51 // pred_check
        %p478 = pneg %p234
      $region54: #{information_bottleneck.5} parent=51 // pred_check_branch
        %480 = sbr.rel (%p478) target = $region56
      $region55: #{information_bottleneck.5} parent=51 // pred_region
        %s481 = smul.u32 2, %s25
      $region56: #{information_bottleneck.5} parent=51 // pred_fallthru
        _
    $region52: #{information_bottleneck.5} parent=5 // pred_fallthru
      _
    %p482 = scmp.le.s32.totalorder 2, %s15
    // Predicated region
    $region57: #{information_bottleneck.5} parent=5 // pred_check
      %p483 = pneg %p482
    $region58: #{information_bottleneck.5} parent=5 // pred_check_branch
      %485 = sbr.rel (%p483) target = $region60
    $region59: #{information_bottleneck.5} parent=5 // pred_region
      %s486 = ssub.s32 %s15, 2
      // Predicated region
      $region61: #{information_bottleneck.5} parent=59 // pred_check
        %p487 = pneg %p240
      $region62: #{information_bottleneck.5} parent=59 // pred_check_branch
        %489 = sbr.rel (%p487) target = $region64
      $region63: #{information_bottleneck.5} parent=59 // pred_region
        %s490 = smul.u32 2, %s27
        %p491 = scmp.lt.s32.totalorder %s26, 1
        %s492 = scalar_select %p491, %s26, 1
        %p493 = scmp.lt.s32.totalorder %s490, 1
        %s494 = scalar_select %p493, %s490, 1
        %s495 = smul.addr %s492, 2
        %s496 = sadd.s32 %s494, %s495
        %s497 = smul.addr %s496, 4
        %s498 = scalar_lea.vmem %s8, %s497
      $region64: #{information_bottleneck.5} parent=59 // pred_fallthru
        _
    $region60: #{information_bottleneck.5} parent=5 // pred_fallthru
      _
  $region6: #{information_bottleneck.5} parent=0 // loop_footer
    %s19 = sadd.s32 1, %s15
  $region7: #{information_bottleneck.5} parent=0 // loop_footer_branch
    %14 = sbr.rel target = $region3
  $region8: #{information_bottleneck.5} parent=0 // loop_exit
    _

</llo_original>
